<compile_context>
chip_gen: v6e
topology: v6e:2x2x1
jax: 0.10.0
libtpu: 0.0.40
codegen_flags: <defaults>
</compile_context>

<pallas_src>
import functools

import jax
import jax.numpy as jnp
from jax.experimental import pallas as pl
from jax.experimental.pallas import tpu as pltpu


def _round_up(x, m):
    return ((x + m - 1) // m) * m


def _lqa_tile_kernel(k_ref, v_ref, wq_ref, sb_ref, hid_ref, pv_ref, gath_ref,
                     g_ref, b_ref, o_ref, *, n_heads, le):
    """One tile of Bt batch rows, fully vectorized over the batch axis.

    k_ref   : (Bt, L*key_dim)        bf16 flattened key rows (lane-dense)
    v_ref   : (Bt, L*embed_dim)      bf16 flattened value rows (lane-dense)
    wq_ref  : (L*key_dim, J)         bf16 learned query folded with multihead view
    sb_ref  : (1, J)                 f32 logits contributed by the k_bias row
    hid_ref : (1, J)                 f32 head id of every (head, position) chunk
    pv_ref  : (J, L*embed_dim + E)   bf16 [Pexp | Vb]: p -> per-element weights
                                     and the v_bias-row output contribution
    gath_ref: (L*embed_dim, E)       bf16 one-hot gather to head output slots
    g_ref   : (1, E)  f32 LayerNorm weight       b_ref: (1, E) f32 LayerNorm bias
    o_ref   : (Bt, E)                LayerNorm'd attention output
    """
    x = k_ref[...]                               # (Bt, L*C) bf16
    y = v_ref[...]                               # (Bt, L*E) bf16

    # Attention logits for every (head, position) chunk: single-pass bf16 MXU
    # matmul, f32 accumulate; bias-row chunks get their constant logit via sb.
    s = jnp.dot(x, wq_ref[...],
                preferred_element_type=jnp.float32) + sb_ref[...]   # (Bt, J)

    # ---- per-head softmax, fully lane-dense (no reshapes / slices / concat) ----
    hid = hid_ref[...]                           # (1, J)
    m_exp = jnp.zeros_like(s)
    for h in range(n_heads):                     # static unroll; H is small
        mask = hid == h
        mh = jnp.max(jnp.where(mask, s, -1e30), axis=-1, keepdims=True)
        m_exp = m_exp + mask.astype(jnp.float32) * mh
    e = jnp.exp(s - m_exp)                       # (Bt, J) EUP
    inv_exp = jnp.zeros_like(s)
    for h in range(n_heads):
        maskf = (hid == h).astype(jnp.float32)
        dh = jnp.sum(e * maskf, axis=-1, keepdims=True)
        inv_exp = inv_exp + maskf * (1.0 / dh)   # one divide per (row, head)
    p = e * inv_exp                              # (Bt, J) per-head softmax

    # ---- weighted value sum: one bf16 MXU pass through [Pexp | Vb], then the
    # value gather at DEFAULT precision with the exact 0/1 bf16 Gath constant.
    r = jnp.dot(p.astype(jnp.bfloat16), pv_ref[...],
                preferred_element_type=jnp.float32)      # (Bt, L*E + E)
    pexp = r[:, :le]                                     # per-element weights
    a_bias = r[:, le:]                                   # v_bias-row contribution
    w = (pexp * y.astype(jnp.float32)).astype(jnp.bfloat16)
    a = jnp.dot(w, gath_ref[...],
                preferred_element_type=jnp.float32) + a_bias        # (Bt, E)
    # TODO(synk): at production E (>=256) the one-hot Gath contraction should be
    # restructured as a strided/segment reduction to cut its E-fold redundant MACs.

    # ---- LayerNorm over embed_dim (biased variance, eps = 1e-5) ----
    n = a.shape[-1]
    mean = jnp.sum(a, axis=-1, keepdims=True) / n
    c = a - mean
    var = jnp.sum(c * c, axis=-1, keepdims=True) / n
    inv = jax.lax.rsqrt(var + 1e-5)
    o_ref[...] = (c * inv * g_ref[...] + b_ref[...]).astype(o_ref.dtype)


def _vmem_capacity_bytes():
    cap = 64 * 1024 * 1024                       # conservative (v7x per-TC) default
    try:
        info = pltpu.get_tpu_info()
        cap = int(getattr(info, "vmem_capacity_bytes", cap))
    except Exception:
        pass
    return cap


def _choose_batch_tile(LC, LE, J, E, in_bytes, budget):
    # Per-row VMEM: double-buffered bf16 key/value tiles + f32 intermediates
    # (s/e/p/m_exp/inv_exp ~5*J, pexp + pexp*y + bf16 copy ~3*LE, r = LE+E,
    #  a / LN temporaries / out ~6*E) + double-buffered out tile.
    per_row = 2 * (LC + LE) * in_bytes
    per_row += 4 * (5 * J + 3 * LE + (LE + E) + 6 * E)
    per_row += 2 * 4 * E
    # Constants resident in VMEM (Wq, [Pexp|Vb], Gath in bf16 + small f32 rows).
    const = 2 * (LC * J + J * (LE + E) + LE * E) + 4 * (2 * J + 2 * E) + (1 << 20)
    avail = max(budget - const, 1 << 20)
    return max(8, min(4096, (avail // per_row) // 8 * 8))


def base_block_forward(keys, values, params, n_heads, *,
                       batch_tile=None, out_dtype=jnp.float32):
    """A = LayerNorm(LearnedQueryAttention(keys, values)) of shape (B, embed_dim).

    Reproduces the reference implementation exactly (up to bf16 matmul rounding),
    including its row-major `.view((B*H, L+1, C//H))` multihead reshape semantics.
    """
    B, L, C = keys.shape
    E = values.shape[-1]
    H = n_heads
    assert C % H == 0 and E % H == 0
    dk, dv = C // H, E // H
    L1 = L + 1
    J = H * L1          # total (head, position) chunks of the multihead view
    Jk = L * H          # chunks from keys/values; the rest from the bias row
    LC, LE = L * C, L * E

    compute_dtype = jnp.bfloat16      # stream keys/values in bf16 (≈all HBM bytes)

    q2 = params["query"].reshape(H, dk).astype(jnp.float32)
    k_bias = params["k_bias"].astype(jnp.float32)
    v_bias = params["v_bias"].astype(jnp.float32)

    # ---- small constant matrices (built once, VMEM-resident across steps) ----
    j_idx = jnp.arange(J)
    head_of_chunk = j_idx // L1                                      # (J,)

    fk = jnp.arange(LC)
    Wq = jnp.where((fk // dk)[:, None] == j_idx[None, :],
                   q2[head_of_chunk[None, :], (fk % dk)[:, None]],
                   0.0).astype(compute_dtype)                        # (L*C, J)

    sb_vals = jnp.sum(k_bias.reshape(H, dk) * q2[head_of_chunk[Jk:]], axis=-1)
    s_bias = jnp.zeros((J,), jnp.float32).at[Jk:].set(sb_vals).reshape(1, J)

    head_id = head_of_chunk.astype(jnp.float32).reshape(1, J)

    fv = jnp.arange(LE)
    o_idx = jnp.arange(E)
    Pexp = (j_idx[:, None] == (fv // dv)[None, :]).astype(jnp.float32)   # (J, L*E)
    Vb = jnp.zeros((J, E), jnp.float32).at[Jk:].set(
        v_bias.reshape(H, dv)[:, o_idx % dv]
        * (head_of_chunk[Jk:, None] == (o_idx // dv)[None, :]))          # (J, E)
    PV = jnp.concatenate([Pexp, Vb], axis=1).astype(compute_dtype)       # (J, L*E+E)

    Gath = ((head_of_chunk[fv // dv][:, None] == (o_idx // dv)[None, :])
            & ((fv % dv)[:, None] == (o_idx % dv)[None, :])
            ).astype(compute_dtype)                                      # (L*E, E)

    gamma = params["ln_weight"].reshape(1, E).astype(jnp.float32)
    beta = params["ln_bias"].reshape(1, E).astype(jnp.float32)

    # ---- batch tiling: contiguous flatten (free), NO wrapper-side padding ----
    keys2 = keys.reshape(B, LC)
    vals2 = values.reshape(B, LE)
    if keys2.dtype != compute_dtype:
        keys2 = keys2.astype(compute_dtype)
    if vals2.dtype != compute_dtype:
        vals2 = vals2.astype(compute_dtype)

    vmem_cap = _vmem_capacity_bytes()
    budget = int(vmem_cap * 0.75)            # ≈48 MiB on v7x, ≈96 MiB on v5e/v6e
    if B <= 8:
        Bt = B                               # single full block (equals array dim)
    elif batch_tile is not None:
        Bt = max(8, min(_round_up(batch_tile, 8), _round_up(B, 8)))
    else:
        Bt = _choose_batch_tile(LC, LE, J, E, 2, budget)
        # Keep ≥2 grid steps (both v7x TensorCores), ~8 steps while tiles stay ≥512.
        Bt = min(Bt, max(512, _round_up(pl.cdiv(B, 8), 8)))
        Bt = min(Bt, _round_up(pl.cdiv(B, 2), 8))
        Bt = max(8, Bt)

    vmem_limit = int(max(32 << 20, min(vmem_cap - (8 << 20), 110 << 20)))

    kernel = functools.partial(_lqa_tile_kernel, n_heads=H, le=LE)
    grid = (pl.cdiv(B, Bt),)                 # ragged last block is masked by Pallas

    def build(single_buffer_consts):
        def const_spec(shape):
            nd = len(shape)

            def idx(i):
                return (0,) * nd

            if single_buffer_consts:
                return pl.BlockSpec(shape, idx, pipeline_mode=pl.Buffered(1))
            return pl.BlockSpec(shape, idx)

        return pl.pallas_call(
            kernel,
            out_shape=jax.ShapeDtypeStruct((B, E), out_dtype),
            grid=grid,
            in_specs=[
                pl.BlockSpec((Bt, LC), lambda i: (i, 0)),
                pl.BlockSpec((Bt, LE), lambda i: (i, 0)),
                const_spec((LC, J)),
                const_spec((1, J)),
                const_spec((1, J)),
                const_spec((J, LE + E)),
                const_spec((LE, E)),
                const_spec((1, E)),
                const_spec((1, E)),
            ],
            out_specs=pl.BlockSpec((Bt, E), lambda i: (i, 0)),
            compiler_params=pltpu.CompilerParams(
                dimension_semantics=("parallel",),
                vmem_limit_bytes=vmem_limit),
        )

    args = (keys2, vals2, Wq, s_bias, head_id, PV, Gath, gamma, beta)
    try:
        out = build(True)(*args)
    except Exception:
        # pipeline_mode=pl.Buffered(1) unsupported on this jax build: fall back to
        # default (double-buffered) constant blocks — semantics are identical.
        out = build(False)(*args)

    # TODO(synk): TransformBlock.block()/BaseBlock.block() is abstract (`pass`), so
    # the key/value re-packing tail of forward() cannot be implemented; the LQA +
    # LayerNorm output A is the only compute the base class defines.
    return out


def _reference(keys, values, params, n_heads):
    """Pure-JAX replica of LearnedQueryAttention.forward (f32, for checking)."""
    keys = keys.astype(jnp.float32)
    values = values.astype(jnp.float32)
    B, L, key_dim = keys.shape
    embed_dim = values.shape[-1]
    H = n_heads
    dk = key_dim // H
    dv = embed_dim // H
    L1 = L + 1

    keys_c = jnp.concatenate(
        [keys, jnp.broadcast_to(params["k_bias"], (B, 1, key_dim))], axis=1)
    vals_c = jnp.concatenate(
        [values, jnp.broadcast_to(params["v_bias"], (B, 1, embed_dim))], axis=1)

    Q = jnp.tile(params["query"], (B, 1, 1))        # (B*H, 1, dk)
    K = keys_c.reshape(B * H, L1, dk)
    V = vals_c.reshape(B * H, L1, dv)
    hi = jax.lax.Precision.HIGHEST
    logits = jnp.einsum("bqd,bkd->bqk", Q, K, precision=hi)
    p = jax.nn.softmax(logits, axis=-1)
    A = jnp.einsum("bqk,bkd->bqd", p, V, precision=hi)
    A = A.reshape(B, 1, embed_dim)
    mean = A.mean(axis=-1, keepdims=True)
    var = ((A - mean) ** 2).mean(axis=-1, keepdims=True)
    A = (A - mean) / jnp.sqrt(var + 1e-5) * params["ln_weight"] + params["ln_bias"]
    return jnp.squeeze(A)


if __name__ == "__main__":
    B, L = 2, 8
    key_dim, embed_dim, n_heads = 32, 32, 4
    dk = key_dim // n_heads

    key = jax.random.PRNGKey(0)
    k0, k1, k2, k3, k4 = jax.random.split(key, 5)

    # keys/values streamed in bf16 end-to-end (per perf review); parameters are
    # made bf16-representable so the kernel's bf16 constant casts are lossless.
    keys = jax.random.normal(k0, (B, L, key_dim), jnp.float32).astype(jnp.bfloat16)
    values = jax.random.normal(k1, (B, L, embed_dim), jnp.float32).astype(jnp.bfloat16)

    def _bf16_exact(x):
        return x.astype(jnp.bfloat16).astype(jnp.float32)

    params = {
        "query": _bf16_exact(0.5 * jax.random.normal(k2, (n_heads, 1, dk), jnp.float32)),
        "k_bias": _bf16_exact(jax.random.normal(k3, (key_dim,), jnp.float32)
                              / jnp.sqrt(jnp.float32(key_dim))),
        "v_bias": _bf16_exact(jax.random.normal(k4, (embed_dim,), jnp.float32)),
        "ln_weight": 1.0 + 0.1 * jnp.arange(embed_dim, dtype=jnp.float32) / embed_dim,
        "ln_bias": 0.01 * jnp.arange(embed_dim, dtype=jnp.float32),
    }

    out = base_block_forward(keys, values, params, n_heads)
    out = jax.block_until_ready(out)

    ref = _reference(keys, values, params, n_heads)
    assert out.shape == (B, embed_dim)
    err = float(jnp.max(jnp.abs(out - ref)))
    # Tolerance reflects single-pass bf16 MXU matmuls (data operand truncated to
    # bf16) on the value path, as sanctioned by the performance review.
    assert jnp.allclose(out, ref, atol=5e-2, rtol=5e-2), f"max abs err = {err}"

    print("KERNEL_OK")
</pallas_src>

<mosaic_0001>
module attributes {stable_mosaic.version = 11 : i64} {
  func.func @_lqa_tile_kernel(%arg0: i32, %arg1: memref<2x256xbf16, #tpu.memory_space<vmem>>, %arg2: memref<2x256xbf16, #tpu.memory_space<vmem>>, %arg3: memref<256x36xbf16, #tpu.memory_space<vmem>>, %arg4: memref<1x36xf32, #tpu.memory_space<vmem>>, %arg5: memref<1x36xf32, #tpu.memory_space<vmem>>, %arg6: memref<36x288xbf16, #tpu.memory_space<vmem>>, %arg7: memref<256x32xbf16, #tpu.memory_space<vmem>>, %arg8: memref<1x32xf32, #tpu.memory_space<vmem>>, %arg9: memref<1x32xf32, #tpu.memory_space<vmem>>, %arg10: memref<2x32xf32, #tpu.memory_space<vmem>>) attributes {dimension_semantics = [#tpu.dimension_semantics<parallel>], iteration_bounds = array<i64: 1>, scalar_prefetch = 0 : i64, scratch_operands = 0 : i64, tpu.core_type = #tpu.core_type<tc>, window_params = [{transform_indices = @transform_0, window_bounds = array<i64: 2, 256>}, {transform_indices = @transform_1, window_bounds = array<i64: 2, 256>}, {pipeline_mode = #tpu.pipeline_mode<synchronous>, transform_indices = @transform_2, window_bounds = array<i64: 256, 36>}, {pipeline_mode = #tpu.pipeline_mode<synchronous>, transform_indices = @transform_3, window_bounds = array<i64: 1, 36>}, {pipeline_mode = #tpu.pipeline_mode<synchronous>, transform_indices = @transform_4, window_bounds = array<i64: 1, 36>}, {pipeline_mode = #tpu.pipeline_mode<synchronous>, transform_indices = @transform_5, window_bounds = array<i64: 36, 288>}, {pipeline_mode = #tpu.pipeline_mode<synchronous>, transform_indices = @transform_6, window_bounds = array<i64: 256, 32>}, {pipeline_mode = #tpu.pipeline_mode<synchronous>, transform_indices = @transform_7, window_bounds = array<i64: 1, 32>}, {pipeline_mode = #tpu.pipeline_mode<synchronous>, transform_indices = @transform_8, window_bounds = array<i64: 1, 32>}, {transform_indices = @transform_9, window_bounds = array<i64: 2, 32>}]} {
    %c0 = arith.constant 0 : index
    %c0_0 = arith.constant 0 : index
    %0 = vector.load %arg1[%c0, %c0_0] : memref<2x256xbf16, #tpu.memory_space<vmem>>, vector<2x256xbf16>
    %c0_1 = arith.constant 0 : index
    %c0_2 = arith.constant 0 : index
    %1 = vector.load %arg2[%c0_1, %c0_2] : memref<2x256xbf16, #tpu.memory_space<vmem>>, vector<2x256xbf16>
    %c0_3 = arith.constant 0 : index
    %c0_4 = arith.constant 0 : index
    %2 = vector.load %arg3[%c0_3, %c0_4] : memref<256x36xbf16, #tpu.memory_space<vmem>>, vector<256x36xbf16>
    %cst = arith.constant dense<0.000000e+00> : vector<2x36xf32>
    %3 = tpu.matmul %0, %2, %cst {dimension_numbers = #tpu.dot_dimension_numbers<[1], [0], [0], [1], [0, 0, 1, 1], [], []>} : vector<2x256xbf16>, vector<256x36xbf16>, vector<2x36xf32> -> vector<2x36xf32>
    %c0_5 = arith.constant 0 : index
    %c0_6 = arith.constant 0 : index
    %4 = vector.load %arg4[%c0_5, %c0_6] : memref<1x36xf32, #tpu.memory_space<vmem>>, vector<1x36xf32>
    %5 = vector.broadcast %4 : vector<1x36xf32> to vector<2x36xf32>
    %6 = arith.addf %3, %5 : vector<2x36xf32>
    %c0_7 = arith.constant 0 : index
    %c0_8 = arith.constant 0 : index
    %7 = vector.load %arg5[%c0_7, %c0_8] : memref<1x36xf32, #tpu.memory_space<vmem>>, vector<1x36xf32>
    %cst_9 = arith.constant 0.000000e+00 : f32
    %8 = vector.broadcast %cst_9 : f32 to vector<2x36xf32>
    %cst_10 = arith.constant 0.000000e+00 : f32
    %9 = vector.broadcast %cst_10 : f32 to vector<1x36xf32>
    %10 = arith.cmpf oeq, %7, %9 : vector<1x36xf32>
    %cst_11 = arith.constant -1.000000e+30 : f32
    %11 = vector.shape_cast %10 : vector<1x36xi1> to vector<1x36xi1>
    %12 = vector.broadcast %11 : vector<1x36xi1> to vector<2x36xi1>
    %13 = vector.broadcast %cst_11 : f32 to vector<2x36xf32>
    %14 = arith.select %12, %6, %13 : vector<2x36xi1>, vector<2x36xf32>
    %cst_12 = arith.constant dense<0xFF800000> : vector<2xf32>
    %15 = vector.multi_reduction <maximumf>, %14, %cst_12 [1] : vector<2x36xf32> to vector<2xf32>
    %16 = vector.shape_cast %15 : vector<2xf32> to vector<2x1xf32>
    %17 = arith.extui %10 : vector<1x36xi1> to vector<1x36xi32>
    %18 = arith.sitofp %17 : vector<1x36xi32> to vector<1x36xf32>
    %19 = vector.broadcast %18 : vector<1x36xf32> to vector<2x36xf32>
    %20 = vector.broadcast %16 : vector<2x1xf32> to vector<2x36xf32>
    %21 = arith.mulf %19, %20 : vector<2x36xf32>
    %22 = arith.addf %8, %21 : vector<2x36xf32>
    %cst_13 = arith.constant 1.000000e+00 : f32
    %23 = vector.broadcast %cst_13 : f32 to vector<1x36xf32>
    %24 = arith.cmpf oeq, %7, %23 : vector<1x36xf32>
    %cst_14 = arith.constant -1.000000e+30 : f32
    %25 = vector.shape_cast %24 : vector<1x36xi1> to vector<1x36xi1>
    %26 = vector.broadcast %25 : vector<1x36xi1> to vector<2x36xi1>
    %27 = vector.broadcast %cst_14 : f32 to vector<2x36xf32>
    %28 = arith.select %26, %6, %27 : vector<2x36xi1>, vector<2x36xf32>
    %cst_15 = arith.constant dense<0xFF800000> : vector<2xf32>
    %29 = vector.multi_reduction <maximumf>, %28, %cst_15 [1] : vector<2x36xf32> to vector<2xf32>
    %30 = vector.shape_cast %29 : vector<2xf32> to vector<2x1xf32>
    %31 = arith.extui %24 : vector<1x36xi1> to vector<1x36xi32>
    %32 = arith.sitofp %31 : vector<1x36xi32> to vector<1x36xf32>
    %33 = vector.broadcast %32 : vector<1x36xf32> to vector<2x36xf32>
    %34 = vector.broadcast %30 : vector<2x1xf32> to vector<2x36xf32>
    %35 = arith.mulf %33, %34 : vector<2x36xf32>
    %36 = arith.addf %22, %35 : vector<2x36xf32>
    %cst_16 = arith.constant 2.000000e+00 : f32
    %37 = vector.broadcast %cst_16 : f32 to vector<1x36xf32>
    %38 = arith.cmpf oeq, %7, %37 : vector<1x36xf32>
    %cst_17 = arith.constant -1.000000e+30 : f32
    %39 = vector.shape_cast %38 : vector<1x36xi1> to vector<1x36xi1>
    %40 = vector.broadcast %39 : vector<1x36xi1> to vector<2x36xi1>
    %41 = vector.broadcast %cst_17 : f32 to vector<2x36xf32>
    %42 = arith.select %40, %6, %41 : vector<2x36xi1>, vector<2x36xf32>
    %cst_18 = arith.constant dense<0xFF800000> : vector<2xf32>
    %43 = vector.multi_reduction <maximumf>, %42, %cst_18 [1] : vector<2x36xf32> to vector<2xf32>
    %44 = vector.shape_cast %43 : vector<2xf32> to vector<2x1xf32>
    %45 = arith.extui %38 : vector<1x36xi1> to vector<1x36xi32>
    %46 = arith.sitofp %45 : vector<1x36xi32> to vector<1x36xf32>
    %47 = vector.broadcast %46 : vector<1x36xf32> to vector<2x36xf32>
    %48 = vector.broadcast %44 : vector<2x1xf32> to vector<2x36xf32>
    %49 = arith.mulf %47, %48 : vector<2x36xf32>
    %50 = arith.addf %36, %49 : vector<2x36xf32>
    %cst_19 = arith.constant 3.000000e+00 : f32
    %51 = vector.broadcast %cst_19 : f32 to vector<1x36xf32>
    %52 = arith.cmpf oeq, %7, %51 : vector<1x36xf32>
    %cst_20 = arith.constant -1.000000e+30 : f32
    %53 = vector.shape_cast %52 : vector<1x36xi1> to vector<1x36xi1>
    %54 = vector.broadcast %53 : vector<1x36xi1> to vector<2x36xi1>
    %55 = vector.broadcast %cst_20 : f32 to vector<2x36xf32>
    %56 = arith.select %54, %6, %55 : vector<2x36xi1>, vector<2x36xf32>
    %cst_21 = arith.constant dense<0xFF800000> : vector<2xf32>
    %57 = vector.multi_reduction <maximumf>, %56, %cst_21 [1] : vector<2x36xf32> to vector<2xf32>
    %58 = vector.shape_cast %57 : vector<2xf32> to vector<2x1xf32>
    %59 = arith.extui %52 : vector<1x36xi1> to vector<1x36xi32>
    %60 = arith.sitofp %59 : vector<1x36xi32> to vector<1x36xf32>
    %61 = vector.broadcast %60 : vector<1x36xf32> to vector<2x36xf32>
    %62 = vector.broadcast %58 : vector<2x1xf32> to vector<2x36xf32>
    %63 = arith.mulf %61, %62 : vector<2x36xf32>
    %64 = arith.addf %50, %63 : vector<2x36xf32>
    %65 = arith.subf %6, %64 : vector<2x36xf32>
    %66 = math.exp %65 : vector<2x36xf32>
    %cst_22 = arith.constant 0.000000e+00 : f32
    %67 = vector.broadcast %cst_22 : f32 to vector<2x36xf32>
    %cst_23 = arith.constant 0.000000e+00 : f32
    %68 = vector.broadcast %cst_23 : f32 to vector<1x36xf32>
    %69 = arith.cmpf oeq, %7, %68 : vector<1x36xf32>
    %70 = arith.extui %69 : vector<1x36xi1> to vector<1x36xi32>
    %71 = arith.sitofp %70 : vector<1x36xi32> to vector<1x36xf32>
    %72 = vector.broadcast %71 : vector<1x36xf32> to vector<2x36xf32>
    %73 = arith.mulf %66, %72 : vector<2x36xf32>
    %cst_24 = arith.constant dense<0.000000e+00> : vector<2xf32>
    %74 = vector.multi_reduction <add>, %73, %cst_24 [1] : vector<2x36xf32> to vector<2xf32>
    %75 = vector.shape_cast %74 : vector<2xf32> to vector<2x1xf32>
    %cst_25 = arith.constant 1.000000e+00 : f32
    %76 = vector.broadcast %cst_25 : f32 to vector<2x1xf32>
    %77 = arith.divf %76, %75 : vector<2x1xf32>
    %78 = vector.broadcast %71 : vector<1x36xf32> to vector<2x36xf32>
    %79 = vector.broadcast %77 : vector<2x1xf32> to vector<2x36xf32>
    %80 = arith.mulf %78, %79 : vector<2x36xf32>
    %81 = arith.addf %67, %80 : vector<2x36xf32>
    %cst_26 = arith.constant 1.000000e+00 : f32
    %82 = vector.broadcast %cst_26 : f32 to vector<1x36xf32>
    %83 = arith.cmpf oeq, %7, %82 : vector<1x36xf32>
    %84 = arith.extui %83 : vector<1x36xi1> to vector<1x36xi32>
    %85 = arith.sitofp %84 : vector<1x36xi32> to vector<1x36xf32>
    %86 = vector.broadcast %85 : vector<1x36xf32> to vector<2x36xf32>
    %87 = arith.mulf %66, %86 : vector<2x36xf32>
    %cst_27 = arith.constant dense<0.000000e+00> : vector<2xf32>
    %88 = vector.multi_reduction <add>, %87, %cst_27 [1] : vector<2x36xf32> to vector<2xf32>
    %89 = vector.shape_cast %88 : vector<2xf32> to vector<2x1xf32>
    %cst_28 = arith.constant 1.000000e+00 : f32
    %90 = vector.broadcast %cst_28 : f32 to vector<2x1xf32>
    %91 = arith.divf %90, %89 : vector<2x1xf32>
    %92 = vector.broadcast %85 : vector<1x36xf32> to vector<2x36xf32>
    %93 = vector.broadcast %91 : vector<2x1xf32> to vector<2x36xf32>
    %94 = arith.mulf %92, %93 : vector<2x36xf32>
    %95 = arith.addf %81, %94 : vector<2x36xf32>
    %cst_29 = arith.constant 2.000000e+00 : f32
    %96 = vector.broadcast %cst_29 : f32 to vector<1x36xf32>
    %97 = arith.cmpf oeq, %7, %96 : vector<1x36xf32>
    %98 = arith.extui %97 : vector<1x36xi1> to vector<1x36xi32>
    %99 = arith.sitofp %98 : vector<1x36xi32> to vector<1x36xf32>
    %100 = vector.broadcast %99 : vector<1x36xf32> to vector<2x36xf32>
    %101 = arith.mulf %66, %100 : vector<2x36xf32>
    %cst_30 = arith.constant dense<0.000000e+00> : vector<2xf32>
    %102 = vector.multi_reduction <add>, %101, %cst_30 [1] : vector<2x36xf32> to vector<2xf32>
    %103 = vector.shape_cast %102 : vector<2xf32> to vector<2x1xf32>
    %cst_31 = arith.constant 1.000000e+00 : f32
    %104 = vector.broadcast %cst_31 : f32 to vector<2x1xf32>
    %105 = arith.divf %104, %103 : vector<2x1xf32>
    %106 = vector.broadcast %99 : vector<1x36xf32> to vector<2x36xf32>
    %107 = vector.broadcast %105 : vector<2x1xf32> to vector<2x36xf32>
    %108 = arith.mulf %106, %107 : vector<2x36xf32>
    %109 = arith.addf %95, %108 : vector<2x36xf32>
    %cst_32 = arith.constant 3.000000e+00 : f32
    %110 = vector.broadcast %cst_32 : f32 to vector<1x36xf32>
    %111 = arith.cmpf oeq, %7, %110 : vector<1x36xf32>
    %112 = arith.extui %111 : vector<1x36xi1> to vector<1x36xi32>
    %113 = arith.sitofp %112 : vector<1x36xi32> to vector<1x36xf32>
    %114 = vector.broadcast %113 : vector<1x36xf32> to vector<2x36xf32>
    %115 = arith.mulf %66, %114 : vector<2x36xf32>
    %cst_33 = arith.constant dense<0.000000e+00> : vector<2xf32>
    %116 = vector.multi_reduction <add>, %115, %cst_33 [1] : vector<2x36xf32> to vector<2xf32>
    %117 = vector.shape_cast %116 : vector<2xf32> to vector<2x1xf32>
    %cst_34 = arith.constant 1.000000e+00 : f32
    %118 = vector.broadcast %cst_34 : f32 to vector<2x1xf32>
    %119 = arith.divf %118, %117 : vector<2x1xf32>
    %120 = vector.broadcast %113 : vector<1x36xf32> to vector<2x36xf32>
    %121 = vector.broadcast %119 : vector<2x1xf32> to vector<2x36xf32>
    %122 = arith.mulf %120, %121 : vector<2x36xf32>
    %123 = arith.addf %109, %122 : vector<2x36xf32>
    %124 = arith.mulf %66, %123 : vector<2x36xf32>
    %125 = arith.truncf %124 : vector<2x36xf32> to vector<2x36xbf16>
    %c0_35 = arith.constant 0 : index
    %c0_36 = arith.constant 0 : index
    %126 = vector.load %arg6[%c0_35, %c0_36] : memref<36x288xbf16, #tpu.memory_space<vmem>>, vector<36x288xbf16>
    %cst_37 = arith.constant dense<0.000000e+00> : vector<2x288xf32>
    %127 = tpu.matmul %125, %126, %cst_37 {dimension_numbers = #tpu.dot_dimension_numbers<[1], [0], [0], [1], [0, 0, 1, 1], [], []>} : vector<2x36xbf16>, vector<36x288xbf16>, vector<2x288xf32> -> vector<2x288xf32>
    %128 = vector.extract_strided_slice %127 {offsets = [0, 0], sizes = [2, 256], strides = [1, 1]} : vector<2x288xf32> to vector<2x256xf32>
    %129 = vector.extract_strided_slice %127 {offsets = [0, 256], sizes = [2, 32], strides = [1, 1]} : vector<2x288xf32> to vector<2x32xf32>
    %130 = arith.extf %1 : vector<2x256xbf16> to vector<2x256xf32>
    %131 = arith.mulf %128, %130 : vector<2x256xf32>
    %132 = arith.truncf %131 : vector<2x256xf32> to vector<2x256xbf16>
    %c0_38 = arith.constant 0 : index
    %c0_39 = arith.constant 0 : index
    %133 = vector.load %arg7[%c0_38, %c0_39] : memref<256x32xbf16, #tpu.memory_space<vmem>>, vector<256x32xbf16>
    %cst_40 = arith.constant dense<0.000000e+00> : vector<2x32xf32>
    %134 = tpu.matmul %132, %133, %cst_40 {dimension_numbers = #tpu.dot_dimension_numbers<[1], [0], [0], [1], [0, 0, 1, 1], [], []>} : vector<2x256xbf16>, vector<256x32xbf16>, vector<2x32xf32> -> vector<2x32xf32>
    %135 = arith.addf %134, %129 : vector<2x32xf32>
    %cst_41 = arith.constant dense<0.000000e+00> : vector<2xf32>
    %136 = vector.multi_reduction <add>, %135, %cst_41 [1] : vector<2x32xf32> to vector<2xf32>
    %137 = vector.shape_cast %136 : vector<2xf32> to vector<2x1xf32>
    %cst_42 = arith.constant 3.200000e+01 : f32
    %138 = vector.broadcast %cst_42 : f32 to vector<2x1xf32>
    %139 = arith.divf %137, %138 : vector<2x1xf32>
    %140 = vector.broadcast %139 : vector<2x1xf32> to vector<2x32xf32>
    %141 = arith.subf %135, %140 : vector<2x32xf32>
    %142 = arith.mulf %141, %141 : vector<2x32xf32>
    %cst_43 = arith.constant dense<0.000000e+00> : vector<2xf32>
    %143 = vector.multi_reduction <add>, %142, %cst_43 [1] : vector<2x32xf32> to vector<2xf32>
    %144 = vector.shape_cast %143 : vector<2xf32> to vector<2x1xf32>
    %cst_44 = arith.constant 3.200000e+01 : f32
    %145 = vector.broadcast %cst_44 : f32 to vector<2x1xf32>
    %146 = arith.divf %144, %145 : vector<2x1xf32>
    %cst_45 = arith.constant 9.99999974E-6 : f32
    %147 = vector.broadcast %cst_45 : f32 to vector<2x1xf32>
    %148 = arith.addf %146, %147 : vector<2x1xf32>
    %149 = math.rsqrt %148 : vector<2x1xf32>
    %150 = vector.broadcast %149 : vector<2x1xf32> to vector<2x32xf32>
    %151 = arith.mulf %141, %150 : vector<2x32xf32>
    %c0_46 = arith.constant 0 : index
    %c0_47 = arith.constant 0 : index
    %152 = vector.load %arg8[%c0_46, %c0_47] : memref<1x32xf32, #tpu.memory_space<vmem>>, vector<1x32xf32>
    %153 = vector.broadcast %152 : vector<1x32xf32> to vector<2x32xf32>
    %154 = arith.mulf %151, %153 : vector<2x32xf32>
    %c0_48 = arith.constant 0 : index
    %c0_49 = arith.constant 0 : index
    %155 = vector.load %arg9[%c0_48, %c0_49] : memref<1x32xf32, #tpu.memory_space<vmem>>, vector<1x32xf32>
    %156 = vector.broadcast %155 : vector<1x32xf32> to vector<2x32xf32>
    %157 = arith.addf %154, %156 : vector<2x32xf32>
    %c0_50 = arith.constant 0 : index
    %c0_51 = arith.constant 0 : index
    %158 = vector.load %arg10[%c0_50, %c0_51] : memref<2x32xf32, #tpu.memory_space<vmem>>, vector<2x32xf32>
    tpu.vector_store %arg10[%c0_50, %c0_51], %157 {strides = array<i32>} : memref<2x32xf32, #tpu.memory_space<vmem>>, vector<2x32xf32>,
    return
  }
  func.func @transform_0(%arg0: i32) -> (i32, i32) {
    %c0_i32 = arith.constant 0 : i32
    %c0_i32_0 = arith.constant 0 : i32
    return %arg0, %c0_i32 : i32, i32
  }
  func.func @transform_1(%arg0: i32) -> (i32, i32) {
    %c0_i32 = arith.constant 0 : i32
    %c0_i32_0 = arith.constant 0 : i32
    return %arg0, %c0_i32 : i32, i32
  }
  func.func @transform_2(%arg0: i32) -> (i32, i32) {
    %c0_i32 = arith.constant 0 : i32
    %c0_i32_0 = arith.constant 0 : i32
    %c0_i32_1 = arith.constant 0 : i32
    return %c0_i32, %c0_i32_0 : i32, i32
  }
  func.func @transform_3(%arg0: i32) -> (i32, i32) {
    %c0_i32 = arith.constant 0 : i32
    %c0_i32_0 = arith.constant 0 : i32
    %c0_i32_1 = arith.constant 0 : i32
    return %c0_i32, %c0_i32_0 : i32, i32
  }
  func.func @transform_4(%arg0: i32) -> (i32, i32) {
    %c0_i32 = arith.constant 0 : i32
    %c0_i32_0 = arith.constant 0 : i32
    %c0_i32_1 = arith.constant 0 : i32
    return %c0_i32, %c0_i32_0 : i32, i32
  }
  func.func @transform_5(%arg0: i32) -> (i32, i32) {
    %c0_i32 = arith.constant 0 : i32
    %c0_i32_0 = arith.constant 0 : i32
    %c0_i32_1 = arith.constant 0 : i32
    return %c0_i32, %c0_i32_0 : i32, i32
  }
  func.func @transform_6(%arg0: i32) -> (i32, i32) {
    %c0_i32 = arith.constant 0 : i32
    %c0_i32_0 = arith.constant 0 : i32
    %c0_i32_1 = arith.constant 0 : i32
    return %c0_i32, %c0_i32_0 : i32, i32
  }
  func.func @transform_7(%arg0: i32) -> (i32, i32) {
    %c0_i32 = arith.constant 0 : i32
    %c0_i32_0 = arith.constant 0 : i32
    %c0_i32_1 = arith.constant 0 : i32
    return %c0_i32, %c0_i32_0 : i32, i32
  }
  func.func @transform_8(%arg0: i32) -> (i32, i32) {
    %c0_i32 = arith.constant 0 : i32
    %c0_i32_0 = arith.constant 0 : i32
    %c0_i32_1 = arith.constant 0 : i32
    return %c0_i32, %c0_i32_0 : i32, i32
  }
  func.func @transform_9(%arg0: i32) -> (i32, i32) {
    %c0_i32 = arith.constant 0 : i32
    %c0_i32_0 = arith.constant 0 : i32
    return %arg0, %c0_i32 : i32, i32
  }
}

module attributes {stable_mosaic.version = 11 : i64} {
  func.func @_lqa_tile_kernel(%arg0: i32, %arg1: memref<2x256xbf16, #tpu.memory_space<vmem>>, %arg2: memref<2x256xbf16, #tpu.memory_space<vmem>>, %arg3: memref<256x36xbf16, #tpu.memory_space<vmem>>, %arg4: memref<1x36xf32, #tpu.memory_space<vmem>>, %arg5: memref<1x36xf32, #tpu.memory_space<vmem>>, %arg6: memref<36x288xbf16, #tpu.memory_space<vmem>>, %arg7: memref<256x32xbf16, #tpu.memory_space<vmem>>, %arg8: memref<1x32xf32, #tpu.memory_space<vmem>>, %arg9: memref<1x32xf32, #tpu.memory_space<vmem>>, %arg10: memref<2x32xf32, #tpu.memory_space<vmem>>) attributes {dimension_semantics = [#tpu.dimension_semantics<parallel>], iteration_bounds = array<i64: 1>, scalar_prefetch = 0 : i64, scratch_operands = 0 : i64, tpu.core_type = #tpu.core_type<tc>, window_params = [{transform_indices = @transform_0, window_bounds = array<i64: 2, 256>}, {transform_indices = @transform_1, window_bounds = array<i64: 2, 256>}, {pipeline_mode = #tpu.pipeline_mode<synchronous>, transform_indices = @transform_2, window_bounds = array<i64: 256, 36>}, {pipeline_mode = #tpu.pipeline_mode<synchronous>, transform_indices = @transform_3, window_bounds = array<i64: 1, 36>}, {pipeline_mode = #tpu.pipeline_mode<synchronous>, transform_indices = @transform_4, window_bounds = array<i64: 1, 36>}, {pipeline_mode = #tpu.pipeline_mode<synchronous>, transform_indices = @transform_5, window_bounds = array<i64: 36, 288>}, {pipeline_mode = #tpu.pipeline_mode<synchronous>, transform_indices = @transform_6, window_bounds = array<i64: 256, 32>}, {pipeline_mode = #tpu.pipeline_mode<synchronous>, transform_indices = @transform_7, window_bounds = array<i64: 1, 32>}, {pipeline_mode = #tpu.pipeline_mode<synchronous>, transform_indices = @transform_8, window_bounds = array<i64: 1, 32>}, {transform_indices = @transform_9, window_bounds = array<i64: 2, 32>}]} {
    %c0 = arith.constant 0 : index
    %c0_0 = arith.constant 0 : index
    %0 = vector.load %arg1[%c0, %c0_0] : memref<2x256xbf16, #tpu.memory_space<vmem>>, vector<2x256xbf16>
    %c0_1 = arith.constant 0 : index
    %c0_2 = arith.constant 0 : index
    %1 = vector.load %arg2[%c0_1, %c0_2] : memref<2x256xbf16, #tpu.memory_space<vmem>>, vector<2x256xbf16>
    %c0_3 = arith.constant 0 : index
    %c0_4 = arith.constant 0 : index
    %2 = vector.load %arg3[%c0_3, %c0_4] : memref<256x36xbf16, #tpu.memory_space<vmem>>, vector<256x36xbf16>
    %cst = arith.constant dense<0.000000e+00> : vector<2x36xf32>
    %3 = tpu.matmul %0, %2, %cst {dimension_numbers = #tpu.dot_dimension_numbers<[1], [0], [0], [1], [0, 0, 1, 1], [], []>} : vector<2x256xbf16>, vector<256x36xbf16>, vector<2x36xf32> -> vector<2x36xf32>
    %c0_5 = arith.constant 0 : index
    %c0_6 = arith.constant 0 : index
    %4 = vector.load %arg4[%c0_5, %c0_6] : memref<1x36xf32, #tpu.memory_space<vmem>>, vector<1x36xf32>
    %5 = vector.broadcast %4 : vector<1x36xf32> to vector<2x36xf32>
    %6 = arith.addf %3, %5 : vector<2x36xf32>
    %c0_7 = arith.constant 0 : index
    %c0_8 = arith.constant 0 : index
    %7 = vector.load %arg5[%c0_7, %c0_8] : memref<1x36xf32, #tpu.memory_space<vmem>>, vector<1x36xf32>
    %cst_9 = arith.constant 0.000000e+00 : f32
    %8 = vector.broadcast %cst_9 : f32 to vector<2x36xf32>
    %cst_10 = arith.constant 0.000000e+00 : f32
    %9 = vector.broadcast %cst_10 : f32 to vector<1x36xf32>
    %10 = arith.cmpf oeq, %7, %9 : vector<1x36xf32>
    %cst_11 = arith.constant -1.000000e+30 : f32
    %11 = vector.shape_cast %10 : vector<1x36xi1> to vector<1x36xi1>
    %12 = vector.broadcast %11 : vector<1x36xi1> to vector<2x36xi1>
    %13 = vector.broadcast %cst_11 : f32 to vector<2x36xf32>
    %14 = arith.select %12, %6, %13 : vector<2x36xi1>, vector<2x36xf32>
    %cst_12 = arith.constant dense<0xFF800000> : vector<2xf32>
    %15 = vector.multi_reduction <maximumf>, %14, %cst_12 [1] : vector<2x36xf32> to vector<2xf32>
    %16 = vector.shape_cast %15 : vector<2xf32> to vector<2x1xf32>
    %17 = arith.extui %10 : vector<1x36xi1> to vector<1x36xi32>
    %18 = arith.sitofp %17 : vector<1x36xi32> to vector<1x36xf32>
    %19 = vector.broadcast %18 : vector<1x36xf32> to vector<2x36xf32>
    %20 = vector.broadcast %16 : vector<2x1xf32> to vector<2x36xf32>
    %21 = arith.mulf %19, %20 : vector<2x36xf32>
    %22 = arith.addf %8, %21 : vector<2x36xf32>
    %cst_13 = arith.constant 1.000000e+00 : f32
    %23 = vector.broadcast %cst_13 : f32 to vector<1x36xf32>
    %24 = arith.cmpf oeq, %7, %23 : vector<1x36xf32>
    %cst_14 = arith.constant -1.000000e+30 : f32
    %25 = vector.shape_cast %24 : vector<1x36xi1> to vector<1x36xi1>
    %26 = vector.broadcast %25 : vector<1x36xi1> to vector<2x36xi1>
    %27 = vector.broadcast %cst_14 : f32 to vector<2x36xf32>
    %28 = arith.select %26, %6, %27 : vector<2x36xi1>, vector<2x36xf32>
    %cst_15 = arith.constant dense<0xFF800000> : vector<2xf32>
    %29 = vector.multi_reduction <maximumf>, %28, %cst_15 [1] : vector<2x36xf32> to vector<2xf32>
    %30 = vector.shape_cast %29 : vector<2xf32> to vector<2x1xf32>
    %31 = arith.extui %24 : vector<1x36xi1> to vector<1x36xi32>
    %32 = arith.sitofp %31 : vector<1x36xi32> to vector<1x36xf32>
    %33 = vector.broadcast %32 : vector<1x36xf32> to vector<2x36xf32>
    %34 = vector.broadcast %30 : vector<2x1xf32> to vector<2x36xf32>
    %35 = arith.mulf %33, %34 : vector<2x36xf32>
    %36 = arith.addf %22, %35 : vector<2x36xf32>
    %cst_16 = arith.constant 2.000000e+00 : f32
    %37 = vector.broadcast %cst_16 : f32 to vector<1x36xf32>
    %38 = arith.cmpf oeq, %7, %37 : vector<1x36xf32>
    %cst_17 = arith.constant -1.000000e+30 : f32
    %39 = vector.shape_cast %38 : vector<1x36xi1> to vector<1x36xi1>
    %40 = vector.broadcast %39 : vector<1x36xi1> to vector<2x36xi1>
    %41 = vector.broadcast %cst_17 : f32 to vector<2x36xf32>
    %42 = arith.select %40, %6, %41 : vector<2x36xi1>, vector<2x36xf32>
    %cst_18 = arith.constant dense<0xFF800000> : vector<2xf32>
    %43 = vector.multi_reduction <maximumf>, %42, %cst_18 [1] : vector<2x36xf32> to vector<2xf32>
    %44 = vector.shape_cast %43 : vector<2xf32> to vector<2x1xf32>
    %45 = arith.extui %38 : vector<1x36xi1> to vector<1x36xi32>
    %46 = arith.sitofp %45 : vector<1x36xi32> to vector<1x36xf32>
    %47 = vector.broadcast %46 : vector<1x36xf32> to vector<2x36xf32>
    %48 = vector.broadcast %44 : vector<2x1xf32> to vector<2x36xf32>
    %49 = arith.mulf %47, %48 : vector<2x36xf32>
    %50 = arith.addf %36, %49 : vector<2x36xf32>
    %cst_19 = arith.constant 3.000000e+00 : f32
    %51 = vector.broadcast %cst_19 : f32 to vector<1x36xf32>
    %52 = arith.cmpf oeq, %7, %51 : vector<1x36xf32>
    %cst_20 = arith.constant -1.000000e+30 : f32
    %53 = vector.shape_cast %52 : vector<1x36xi1> to vector<1x36xi1>
    %54 = vector.broadcast %53 : vector<1x36xi1> to vector<2x36xi1>
    %55 = vector.broadcast %cst_20 : f32 to vector<2x36xf32>
    %56 = arith.select %54, %6, %55 : vector<2x36xi1>, vector<2x36xf32>
    %cst_21 = arith.constant dense<0xFF800000> : vector<2xf32>
    %57 = vector.multi_reduction <maximumf>, %56, %cst_21 [1] : vector<2x36xf32> to vector<2xf32>
    %58 = vector.shape_cast %57 : vector<2xf32> to vector<2x1xf32>
    %59 = arith.extui %52 : vector<1x36xi1> to vector<1x36xi32>
    %60 = arith.sitofp %59 : vector<1x36xi32> to vector<1x36xf32>
    %61 = vector.broadcast %60 : vector<1x36xf32> to vector<2x36xf32>
    %62 = vector.broadcast %58 : vector<2x1xf32> to vector<2x36xf32>
    %63 = arith.mulf %61, %62 : vector<2x36xf32>
    %64 = arith.addf %50, %63 : vector<2x36xf32>
    %65 = arith.subf %6, %64 : vector<2x36xf32>
    %66 = math.exp %65 : vector<2x36xf32>
    %cst_22 = arith.constant 0.000000e+00 : f32
    %67 = vector.broadcast %cst_22 : f32 to vector<2x36xf32>
    %cst_23 = arith.constant 0.000000e+00 : f32
    %68 = vector.broadcast %cst_23 : f32 to vector<1x36xf32>
    %69 = arith.cmpf oeq, %7, %68 : vector<1x36xf32>
    %70 = arith.extui %69 : vector<1x36xi1> to vector<1x36xi32>
    %71 = arith.sitofp %70 : vector<1x36xi32> to vector<1x36xf32>
    %72 = vector.broadcast %71 : vector<1x36xf32> to vector<2x36xf32>
    %73 = arith.mulf %66, %72 : vector<2x36xf32>
    %cst_24 = arith.constant dense<0.000000e+00> : vector<2xf32>
    %74 = vector.multi_reduction <add>, %73, %cst_24 [1] : vector<2x36xf32> to vector<2xf32>
    %75 = vector.shape_cast %74 : vector<2xf32> to vector<2x1xf32>
    %cst_25 = arith.constant 1.000000e+00 : f32
    %76 = vector.broadcast %cst_25 : f32 to vector<2x1xf32>
    %77 = arith.divf %76, %75 : vector<2x1xf32>
    %78 = vector.broadcast %71 : vector<1x36xf32> to vector<2x36xf32>
    %79 = vector.broadcast %77 : vector<2x1xf32> to vector<2x36xf32>
    %80 = arith.mulf %78, %79 : vector<2x36xf32>
    %81 = arith.addf %67, %80 : vector<2x36xf32>
    %cst_26 = arith.constant 1.000000e+00 : f32
    %82 = vector.broadcast %cst_26 : f32 to vector<1x36xf32>
    %83 = arith.cmpf oeq, %7, %82 : vector<1x36xf32>
    %84 = arith.extui %83 : vector<1x36xi1> to vector<1x36xi32>
    %85 = arith.sitofp %84 : vector<1x36xi32> to vector<1x36xf32>
    %86 = vector.broadcast %85 : vector<1x36xf32> to vector<2x36xf32>
    %87 = arith.mulf %66, %86 : vector<2x36xf32>
    %cst_27 = arith.constant dense<0.000000e+00> : vector<2xf32>
    %88 = vector.multi_reduction <add>, %87, %cst_27 [1] : vector<2x36xf32> to vector<2xf32>
    %89 = vector.shape_cast %88 : vector<2xf32> to vector<2x1xf32>
    %cst_28 = arith.constant 1.000000e+00 : f32
    %90 = vector.broadcast %cst_28 : f32 to vector<2x1xf32>
    %91 = arith.divf %90, %89 : vector<2x1xf32>
    %92 = vector.broadcast %85 : vector<1x36xf32> to vector<2x36xf32>
    %93 = vector.broadcast %91 : vector<2x1xf32> to vector<2x36xf32>
    %94 = arith.mulf %92, %93 : vector<2x36xf32>
    %95 = arith.addf %81, %94 : vector<2x36xf32>
    %cst_29 = arith.constant 2.000000e+00 : f32
    %96 = vector.broadcast %cst_29 : f32 to vector<1x36xf32>
    %97 = arith.cmpf oeq, %7, %96 : vector<1x36xf32>
    %98 = arith.extui %97 : vector<1x36xi1> to vector<1x36xi32>
    %99 = arith.sitofp %98 : vector<1x36xi32> to vector<1x36xf32>
    %100 = vector.broadcast %99 : vector<1x36xf32> to vector<2x36xf32>
    %101 = arith.mulf %66, %100 : vector<2x36xf32>
    %cst_30 = arith.constant dense<0.000000e+00> : vector<2xf32>
    %102 = vector.multi_reduction <add>, %101, %cst_30 [1] : vector<2x36xf32> to vector<2xf32>
    %103 = vector.shape_cast %102 : vector<2xf32> to vector<2x1xf32>
    %cst_31 = arith.constant 1.000000e+00 : f32
    %104 = vector.broadcast %cst_31 : f32 to vector<2x1xf32>
    %105 = arith.divf %104, %103 : vector<2x1xf32>
    %106 = vector.broadcast %99 : vector<1x36xf32> to vector<2x36xf32>
    %107 = vector.broadcast %105 : vector<2x1xf32> to vector<2x36xf32>
    %108 = arith.mulf %106, %107 : vector<2x36xf32>
    %109 = arith.addf %95, %108 : vector<2x36xf32>
    %cst_32 = arith.constant 3.000000e+00 : f32
    %110 = vector.broadcast %cst_32 : f32 to vector<1x36xf32>
    %111 = arith.cmpf oeq, %7, %110 : vector<1x36xf32>
    %112 = arith.extui %111 : vector<1x36xi1> to vector<1x36xi32>
    %113 = arith.sitofp %112 : vector<1x36xi32> to vector<1x36xf32>
    %114 = vector.broadcast %113 : vector<1x36xf32> to vector<2x36xf32>
    %115 = arith.mulf %66, %114 : vector<2x36xf32>
    %cst_33 = arith.constant dense<0.000000e+00> : vector<2xf32>
    %116 = vector.multi_reduction <add>, %115, %cst_33 [1] : vector<2x36xf32> to vector<2xf32>
    %117 = vector.shape_cast %116 : vector<2xf32> to vector<2x1xf32>
    %cst_34 = arith.constant 1.000000e+00 : f32
    %118 = vector.broadcast %cst_34 : f32 to vector<2x1xf32>
    %119 = arith.divf %118, %117 : vector<2x1xf32>
    %120 = vector.broadcast %113 : vector<1x36xf32> to vector<2x36xf32>
    %121 = vector.broadcast %119 : vector<2x1xf32> to vector<2x36xf32>
    %122 = arith.mulf %120, %121 : vector<2x36xf32>
    %123 = arith.addf %109, %122 : vector<2x36xf32>
    %124 = arith.mulf %66, %123 : vector<2x36xf32>
    %125 = arith.truncf %124 : vector<2x36xf32> to vector<2x36xbf16>
    %c0_35 = arith.constant 0 : index
    %c0_36 = arith.constant 0 : index
    %126 = vector.load %arg6[%c0_35, %c0_36] : memref<36x288xbf16, #tpu.memory_space<vmem>>, vector<36x288xbf16>
    %cst_37 = arith.constant dense<0.000000e+00> : vector<2x288xf32>
    %127 = tpu.matmul %125, %126, %cst_37 {dimension_numbers = #tpu.dot_dimension_numbers<[1], [0], [0], [1], [0, 0, 1, 1], [], []>} : vector<2x36xbf16>, vector<36x288xbf16>, vector<2x288xf32> -> vector<2x288xf32>
    %128 = vector.extract_strided_slice %127 {offsets = [0, 0], sizes = [2, 256], strides = [1, 1]} : vector<2x288xf32> to vector<2x256xf32>
    %129 = vector.extract_strided_slice %127 {offsets = [0, 256], sizes = [2, 32], strides = [1, 1]} : vector<2x288xf32> to vector<2x32xf32>
    %130 = arith.extf %1 : vector<2x256xbf16> to vector<2x256xf32>
    %131 = arith.mulf %128, %130 : vector<2x256xf32>
    %132 = arith.truncf %131 : vector<2x256xf32> to vector<2x256xbf16>
    %c0_38 = arith.constant 0 : index
    %c0_39 = arith.constant 0 : index
    %133 = vector.load %arg7[%c0_38, %c0_39] : memref<256x32xbf16, #tpu.memory_space<vmem>>, vector<256x32xbf16>
    %cst_40 = arith.constant dense<0.000000e+00> : vector<2x32xf32>
    %134 = tpu.matmul %132, %133, %cst_40 {dimension_numbers = #tpu.dot_dimension_numbers<[1], [0], [0], [1], [0, 0, 1, 1], [], []>} : vector<2x256xbf16>, vector<256x32xbf16>, vector<2x32xf32> -> vector<2x32xf32>
    %135 = arith.addf %134, %129 : vector<2x32xf32>
    %cst_41 = arith.constant dense<0.000000e+00> : vector<2xf32>
    %136 = vector.multi_reduction <add>, %135, %cst_41 [1] : vector<2x32xf32> to vector<2xf32>
    %137 = vector.shape_cast %136 : vector<2xf32> to vector<2x1xf32>
    %cst_42 = arith.constant 3.200000e+01 : f32
    %138 = vector.broadcast %cst_42 : f32 to vector<2x1xf32>
    %139 = arith.divf %137, %138 : vector<2x1xf32>
    %140 = vector.broadcast %139 : vector<2x1xf32> to vector<2x32xf32>
    %141 = arith.subf %135, %140 : vector<2x32xf32>
    %142 = arith.mulf %141, %141 : vector<2x32xf32>
    %cst_43 = arith.constant dense<0.000000e+00> : vector<2xf32>
    %143 = vector.multi_reduction <add>, %142, %cst_43 [1] : vector<2x32xf32> to vector<2xf32>
    %144 = vector.shape_cast %143 : vector<2xf32> to vector<2x1xf32>
    %cst_44 = arith.constant 3.200000e+01 : f32
    %145 = vector.broadcast %cst_44 : f32 to vector<2x1xf32>
    %146 = arith.divf %144, %145 : vector<2x1xf32>
    %cst_45 = arith.constant 9.99999974E-6 : f32
    %147 = vector.broadcast %cst_45 : f32 to vector<2x1xf32>
    %148 = arith.addf %146, %147 : vector<2x1xf32>
    %149 = math.rsqrt %148 : vector<2x1xf32>
    %150 = vector.broadcast %149 : vector<2x1xf32> to vector<2x32xf32>
    %151 = arith.mulf %141, %150 : vector<2x32xf32>
    %c0_46 = arith.constant 0 : index
    %c0_47 = arith.constant 0 : index
    %152 = vector.load %arg8[%c0_46, %c0_47] : memref<1x32xf32, #tpu.memory_space<vmem>>, vector<1x32xf32>
    %153 = vector.broadcast %152 : vector<1x32xf32> to vector<2x32xf32>
    %154 = arith.mulf %151, %153 : vector<2x32xf32>
    %c0_48 = arith.constant 0 : index
    %c0_49 = arith.constant 0 : index
    %155 = vector.load %arg9[%c0_48, %c0_49] : memref<1x32xf32, #tpu.memory_space<vmem>>, vector<1x32xf32>
    %156 = vector.broadcast %155 : vector<1x32xf32> to vector<2x32xf32>
    %157 = arith.addf %154, %156 : vector<2x32xf32>
    %c0_50 = arith.constant 0 : index
    %c0_51 = arith.constant 0 : index
    %158 = vector.load %arg10[%c0_50, %c0_51] : memref<2x32xf32, #tpu.memory_space<vmem>>, vector<2x32xf32>
    tpu.vector_store %arg10[%c0_50, %c0_51], %157 {strides = array<i32>} : memref<2x32xf32, #tpu.memory_space<vmem>>, vector<2x32xf32>,
    return
  }
  func.func @transform_0(%arg0: i32) -> (i32, i32) {
    %c0_i32 = arith.constant 0 : i32
    %c0_i32_0 = arith.constant 0 : i32
    return %arg0, %c0_i32 : i32, i32
  }
  func.func @transform_1(%arg0: i32) -> (i32, i32) {
    %c0_i32 = arith.constant 0 : i32
    %c0_i32_0 = arith.constant 0 : i32
    return %arg0, %c0_i32 : i32, i32
  }
  func.func @transform_2(%arg0: i32) -> (i32, i32) {
    %c0_i32 = arith.constant 0 : i32
    %c0_i32_0 = arith.constant 0 : i32
    %c0_i32_1 = arith.constant 0 : i32
    return %c0_i32, %c0_i32_0 : i32, i32
  }
  func.func @transform_3(%arg0: i32) -> (i32, i32) {
    %c0_i32 = arith.constant 0 : i32
    %c0_i32_0 = arith.constant 0 : i32
    %c0_i32_1 = arith.constant 0 : i32
    return %c0_i32, %c0_i32_0 : i32, i32
  }
  func.func @transform_4(%arg0: i32) -> (i32, i32) {
    %c0_i32 = arith.constant 0 : i32
    %c0_i32_0 = arith.constant 0 : i32
    %c0_i32_1 = arith.constant 0 : i32
    return %c0_i32, %c0_i32_0 : i32, i32
  }
  func.func @transform_5(%arg0: i32) -> (i32, i32) {
    %c0_i32 = arith.constant 0 : i32
    %c0_i32_0 = arith.constant 0 : i32
    %c0_i32_1 = arith.constant 0 : i32
    return %c0_i32, %c0_i32_0 : i32, i32
  }
  func.func @transform_6(%arg0: i32) -> (i32, i32) {
    %c0_i32 = arith.constant 0 : i32
    %c0_i32_0 = arith.constant 0 : i32
    %c0_i32_1 = arith.constant 0 : i32
    return %c0_i32, %c0_i32_0 : i32, i32
  }
  func.func @transform_7(%arg0: i32) -> (i32, i32) {
    %c0_i32 = arith.constant 0 : i32
    %c0_i32_0 = arith.constant 0 : i32
    %c0_i32_1 = arith.constant 0 : i32
    return %c0_i32, %c0_i32_0 : i32, i32
  }
  func.func @transform_8(%arg0: i32) -> (i32, i32) {
    %c0_i32 = arith.constant 0 : i32
    %c0_i32_0 = arith.constant 0 : i32
    %c0_i32_1 = arith.constant 0 : i32
    return %c0_i32, %c0_i32_0 : i32, i32
  }
  func.func @transform_9(%arg0: i32) -> (i32, i32) {
    %c0_i32 = arith.constant 0 : i32
    %c0_i32_0 = arith.constant 0 : i32
    return %arg0, %c0_i32 : i32, i32
  }
}

</mosaic_0001>

<llo_original>
// kernel: tpu_custom_call.1
$region0: #{tpu_custom_call.1}
  #allocation0 [shape = 'u32[]', space=smem, size = 0x4, offset = 0x4, fixed_abs, tag = 'smem constant byte address 0x4 - core index']
  #allocation1 [shape = 'u32[144,128]{1,0:T(1,128)}', space=vmem, size = 0x12000, scoped, tag = 'internal scratch']
  %s0 = inlined_call_operand.vmem [shape: bf16[2,256], index: 0, kind: input, shape index: {}]
  %s1 = inlined_call_operand.vmem [shape: bf16[2,256], index: 1, kind: input, shape index: {}]
  %s2 = inlined_call_operand.vmem [shape: bf16[256,36], index: 2, kind: input, shape index: {}]
  %s3 = inlined_call_operand.vmem [shape: f32[1,36], index: 3, kind: input, shape index: {}]
  %s4 = inlined_call_operand.vmem [shape: f32[1,36], index: 4, kind: input, shape index: {}]
  %s5 = inlined_call_operand.vmem [shape: bf16[36,288], index: 5, kind: input, shape index: {}]
  %s6 = inlined_call_operand.vmem [shape: bf16[256,32], index: 6, kind: input, shape index: {}]
  %s7 = inlined_call_operand.vmem [shape: f32[1,32], index: 7, kind: input, shape index: {}]
  %s8 = inlined_call_operand.vmem [shape: f32[1,32], index: 8, kind: input, shape index: {}]
  %s9 = inlined_call_operand.hbm [shape: f32[2,32], index: 9, kind: output, shape index: {}]
  %s10 = sld [smem:[#allocation0]]
  $region46: #{tpu_custom_call.1} parent=0
    _
  %s12 = ssub.s32 1, %s10
  %s13 = scalar_select 0, %s12, %s10
  $region1: #{tpu_custom_call.1} parent=0
    #allocation2 [shape = 'u8[1024]{0}', space=vmem, size = 0x400, scoped, tag = 'output window, operand 0, single buffered']
    #allocation3 [shape = 's32[1]{0}', space=sflag, size = 0x4, scoped, tag = 'scoped memory for tpu_custom_call.1']
    %14 = vsyncpa [#allocation3], 0
    // Predicated region
    $region2: #{tpu_custom_call.1} parent=1 // pred_check
      _
    $region3: #{tpu_custom_call.1} parent=1 // pred_check_branch
      %16 = sbr.rel (0) target = $region5
    $region4: #{tpu_custom_call.1} parent=1 // pred_region
      _
    $region5: #{tpu_custom_call.1} parent=1 // pred_fallthru
      _
    // Predicated region
    $region6: #{tpu_custom_call.1} parent=1 // pred_check
      _
    $region7: #{tpu_custom_call.1} parent=1 // pred_check_branch
      %18 = sbr.rel (0) target = $region9
    $region8: #{tpu_custom_call.1} parent=1 // pred_region
      _
    $region9: #{tpu_custom_call.1} parent=1 // pred_fallthru
      _
    // Predicated region
    $region10: #{tpu_custom_call.1} parent=1 // pred_check
      _
    $region11: #{tpu_custom_call.1} parent=1 // pred_check_branch
      %20 = sbr.rel (0) target = $region13
    $region12: #{tpu_custom_call.1} parent=1 // pred_region
      _
    $region13: #{tpu_custom_call.1} parent=1 // pred_fallthru
      _
    // Predicated region
    $region14: #{tpu_custom_call.1} parent=1 // pred_check
      _
    $region15: #{tpu_custom_call.1} parent=1 // pred_check_branch
      %22 = sbr.rel (0) target = $region17
    $region16: #{tpu_custom_call.1} parent=1 // pred_region
      _
    $region17: #{tpu_custom_call.1} parent=1 // pred_fallthru
      _
    // Predicated region
    $region18: #{tpu_custom_call.1} parent=1 // pred_check
      _
    $region19: #{tpu_custom_call.1} parent=1 // pred_check_branch
      %24 = sbr.rel (0) target = $region21
    $region20: #{tpu_custom_call.1} parent=1 // pred_region
      _
    $region21: #{tpu_custom_call.1} parent=1 // pred_fallthru
      _
    // Predicated region
    $region22: #{tpu_custom_call.1} parent=1 // pred_check
      _
    $region23: #{tpu_custom_call.1} parent=1 // pred_check_branch
      %26 = sbr.rel (0) target = $region25
    $region24: #{tpu_custom_call.1} parent=1 // pred_region
      _
    $region25: #{tpu_custom_call.1} parent=1 // pred_fallthru
      _
    // Predicated region
    $region26: #{tpu_custom_call.1} parent=1 // pred_check
      _
    $region27: #{tpu_custom_call.1} parent=1 // pred_check_branch
      %28 = sbr.rel (0) target = $region29
    $region28: #{tpu_custom_call.1} parent=1 // pred_region
      _
    $region29: #{tpu_custom_call.1} parent=1 // pred_fallthru
      _
    // Predicated region
    $region30: #{tpu_custom_call.1} parent=1 // pred_check
      _
    $region31: #{tpu_custom_call.1} parent=1 // pred_check_branch
      %30 = sbr.rel (0) target = $region33
    $region32: #{tpu_custom_call.1} parent=1 // pred_region
      _
    $region33: #{tpu_custom_call.1} parent=1 // pred_fallthru
      _
    // Predicated region
    $region34: #{tpu_custom_call.1} parent=1 // pred_check
      _
    $region35: #{tpu_custom_call.1} parent=1 // pred_check_branch
      %32 = sbr.rel (0) target = $region37
    $region36: #{tpu_custom_call.1} parent=1 // pred_region
      _
    $region37: #{tpu_custom_call.1} parent=1 // pred_fallthru
      _
    %v34 = vld [vmem:[%s0] sm:$0x3]
    %v35 = vld [vmem:[%s1] sm:$0x3]
    %v36 = vld [vmem:[%s2] sm:$0xf]
    %v37 = vld [vmem:[%s2 + $0x4] sm:$0xf]
    %v38 = vld [vmem:[%s2 + $0x8] sm:$0xf]
    %v39 = vld [vmem:[%s2 + $0xc] sm:$0xf]
    %v40 = vld [vmem:[%s2 + $0x10] sm:$0xf]
    %v41 = vld [vmem:[%s2 + $0x14] sm:$0xf]
    %v42 = vld [vmem:[%s2 + $0x18] sm:$0xf]
    %v43 = vld [vmem:[%s2 + $0x1c] sm:$0xf]
    %v44 = vld [vmem:[%s2 + $0x20] sm:$0xf]
    %v45 = vld [vmem:[%s2 + $0x24] sm:$0xf]
    %v46 = vld [vmem:[%s2 + $0x28] sm:$0xf]
    %v47 = vld [vmem:[%s2 + $0x2c] sm:$0xf]
    %v48 = vld [vmem:[%s2 + $0x30] sm:$0xf]
    %v49 = vld [vmem:[%s2 + $0x34] sm:$0xf]
    %v50 = vld [vmem:[%s2 + $0x38] sm:$0xf]
    %v51 = vld [vmem:[%s2 + $0x3c] sm:$0xf]
    %v52 = vld [vmem:[%s2 + $0x40] sm:$0xf]
    %v53 = vld [vmem:[%s2 + $0x44] sm:$0xf]
    %v54 = vld [vmem:[%s2 + $0x48] sm:$0xf]
    %v55 = vld [vmem:[%s2 + $0x4c] sm:$0xf]
    %v56 = vld [vmem:[%s2 + $0x50] sm:$0xf]
    %v57 = vld [vmem:[%s2 + $0x54] sm:$0xf]
    %v58 = vld [vmem:[%s2 + $0x58] sm:$0xf]
    %v59 = vld [vmem:[%s2 + $0x5c] sm:$0xf]
    %v60 = vld [vmem:[%s2 + $0x60] sm:$0xf]
    %v61 = vld [vmem:[%s2 + $0x64] sm:$0xf]
    %v62 = vld [vmem:[%s2 + $0x68] sm:$0xf]
    %v63 = vld [vmem:[%s2 + $0x6c] sm:$0xf]
    %v64 = vld [vmem:[%s2 + $0x70] sm:$0xf]
    %v65 = vld [vmem:[%s2 + $0x74] sm:$0xf]
    %v66 = vld [vmem:[%s2 + $0x78] sm:$0xf]
    %v67 = vld [vmem:[%s2 + $0x7c] sm:$0xf]
    %v68 = vld [vmem:[%s3] sm:$0x1]
    %v70 = vlaneseq
    %v71 = vshrl.u32 %v70, 7
    %v72 = vsub.s32 0, %v71
    %v73 = vrot.slane %v68, %v72
    %v77 = vunpack.c.l.s4 1966171168
    %v78 = vunpack.c.0.s8 %v77
    %v79 = vlaneseq
    %v80 = vshrl.u32 %v79, 7
    %v81 = vsub.s32 %v78, %v80
    %v82 = vrot.slane %v34, %v81
    %v83 = vcombine.high %v82, %v82
    %v85 = vunpack.c.l.s4 1966171168
    %v86 = vunpack.c.0.s8 %v85
    %v87 = vlaneseq
    %v88 = vshrl.u32 %v87, 7
    %v89 = vsub.s32 %v86, %v88
    %v90 = vrot.slane %v82, %v89
    %v92 = vunpack.c.l.s4 1966171168
    %v93 = vunpack.c.0.s8 %v92
    %v94 = vlaneseq
    %v95 = vshrl.u32 %v94, 7
    %v96 = vsub.s32 %v93, %v95
    %v97 = vrot.slane %v83, %v96
    %v132 = vunpack.c.l.b16 %v36
    %v133 = vunpack.c.l.b16 %v37
    %v134 = vunpack.c.l.b16 %v38
    %v135 = vunpack.c.l.b16 %v39
    %v136 = vunpack.c.l.b16 %v40
    %v137 = vunpack.c.l.b16 %v41
    %v138 = vunpack.c.l.b16 %v42
    %v139 = vunpack.c.l.b16 %v43
    %v140 = vunpack.c.l.b16 %v44
    %v141 = vunpack.c.l.b16 %v45
    %v142 = vunpack.c.l.b16 %v46
    %v143 = vunpack.c.l.b16 %v47
    %v144 = vunpack.c.l.b16 %v48
    %v145 = vunpack.c.l.b16 %v49
    %v146 = vunpack.c.l.b16 %v50
    %v147 = vunpack.c.l.b16 %v51
    %v148 = vunpack.c.l.b16 %v52
    %v149 = vunpack.c.l.b16 %v53
    %v150 = vunpack.c.l.b16 %v54
    %v151 = vunpack.c.l.b16 %v55
    %v152 = vunpack.c.l.b16 %v56
    %v153 = vunpack.c.l.b16 %v57
    %v154 = vunpack.c.l.b16 %v58
    %v155 = vunpack.c.l.b16 %v59
    %v156 = vunpack.c.l.b16 %v60
    %v157 = vunpack.c.l.b16 %v61
    %v158 = vunpack.c.l.b16 %v62
    %v159 = vunpack.c.l.b16 %v63
    %v160 = vunpack.c.l.b16 %v64
    %v161 = vunpack.c.l.b16 %v65
    %v162 = vunpack.c.l.b16 %v66
    %v163 = vunpack.c.l.b16 %v67
    %v164 = vpack.c.b16 %v133, %v132
    %v165 = vpack.c.b16 %v135, %v134
    %v166 = vpack.c.b16 %v137, %v136
    %v167 = vpack.c.b16 %v139, %v138
    %v168 = vpack.c.b16 %v141, %v140
    %v169 = vpack.c.b16 %v143, %v142
    %v170 = vpack.c.b16 %v145, %v144
    %v171 = vpack.c.b16 %v147, %v146
    %v172 = vpack.c.b16 %v149, %v148
    %v173 = vpack.c.b16 %v151, %v150
    %v174 = vpack.c.b16 %v153, %v152
    %v175 = vpack.c.b16 %v155, %v154
    %v176 = vpack.c.b16 %v157, %v156
    %v177 = vpack.c.b16 %v159, %v158
    %v178 = vpack.c.b16 %v161, %v160
    %v179 = vpack.c.b16 %v163, %v162
    %196 = vmatprep.subr.bf16.mxu0 0
    %197 = vmatpush1.bf16.msra.mxu0 %v171
    %198 = vmatprep.subr.bf16.mxu0 0
    %199 = vmatpush1.bf16.msra.mxu0 %v170
    %200 = vmatprep.subr.bf16.mxu0 0
    %201 = vmatpush1.bf16.msra.mxu0 %v169
    %202 = vmatprep.subr.bf16.mxu0 0
    %203 = vmatpush1.bf16.msra.mxu0 %v168
    %204 = vmatprep.subr.bf16.mxu0 0
    %205 = vmatpush1.bf16.msra.mxu0 %v167
    %206 = vmatprep.subr.bf16.mxu0 0
    %207 = vmatpush1.bf16.msra.mxu0 %v166
    %208 = vmatprep.subr.bf16.mxu0 0
    %209 = vmatpush1.bf16.msra.mxu0 %v165
    %210 = vmatprep.subr.bf16.mxu0 0
    %211 = vmatpush1.bf16.msra.mxu0 %v164
    %212 = vmatprep.subr.bf16.mxu0 0
    %213 = vmatpush2.bf16.msra.mxu0 %v179
    %214 = vmatprep.subr.bf16.mxu0 0
    %215 = vmatpush2.bf16.msra.mxu0 %v178
    %216 = vmatprep.subr.bf16.mxu0 0
    %217 = vmatpush2.bf16.msra.mxu0 %v177
    %218 = vmatprep.subr.bf16.mxu0 0
    %219 = vmatpush2.bf16.msra.mxu0 %v176
    %220 = vmatprep.subr.bf16.mxu0 0
    %221 = vmatpush2.bf16.msra.mxu0 %v175
    %222 = vmatprep.subr.bf16.mxu0 0
    %223 = vmatpush2.bf16.msra.mxu0 %v174
    %224 = vmatprep.subr.bf16.mxu0 0
    %225 = vmatpush2.bf16.msra.mxu0 %v173
    %226 = vmatprep.subr.bf16.mxu0 0
    %227 = vmatpush2.bf16.msra.mxu0 %v172
    %228 = vmatprep.mubr.bf16.mxu0 %v97
    %229 = vmatmul.mubr.bf16.gmra.mxu0 %v90
    %v230 = vpop.f32.mrf.mxu0
    %v231 = vadd.f32 %v73, %v230
    %v232 = vpop.f32.mrf.mxu0
    %v233 = vpop.f32.mrf.mxu0
    %v234 = vpop.f32.mrf.mxu0
    %235 = vdwg.mxu0
    %v236 = vld [vmem:[%s4] sm:$0x1]
    %vm237 = vcmp.eq.f32.partialorder %v236, 0.0
    %v238 = vsel %vm237, 1, 0
    %v239 = vlaneseq
    %v240 = vshrl.u32 %v239, 7
    %v241 = vsub.s32 0, %v240
    %v242 = vrot.slane %v238, %v241
    %vm243 = vcmp.eq.s32.totalorder %v242, 1
    %v244 = vsel %vm243, %v231, -1e+30
    %vm245 = vcmask 287744
    %v246 = vsel %vm245, %v244, -inf
    %247 = vmax.xlane.f32.xlu0 %v246
    %v248 = vpop.xlane.xlu0 %247
    %v249 = vcvt.s32.f32 %v238
    %v251 = vlaneseq
    %v252 = vshrl.u32 %v251, 7
    %v253 = vsub.s32 0, %v252
    %v254 = vrot.slane %v249, %v253
    %v256 = vmul.f32 %v254, %v248
    %v257 = vadd.f32 %v256, 0.0
    %vm258 = vcmp.eq.f32.partialorder %v236, 1.0
    %v259 = vsel %vm258, 1, 0
    %v260 = vlaneseq
    %v261 = vshrl.u32 %v260, 7
    %v262 = vsub.s32 0, %v261
    %v263 = vrot.slane %v259, %v262
    %vm264 = vcmp.eq.s32.totalorder %v263, 1
    %v265 = vsel %vm264, %v231, -1e+30
    %v266 = vsel %vm245, %v265, -inf
    %267 = vmax.xlane.f32.xlu0 %v266
    %v268 = vpop.xlane.xlu0 %267
    %v269 = vcvt.s32.f32 %v259
    %v271 = vlaneseq
    %v272 = vshrl.u32 %v271, 7
    %v273 = vsub.s32 0, %v272
    %v274 = vrot.slane %v269, %v273
    %v276 = vmul.f32 %v274, %v268
    %v277 = vadd.f32 %v257, %v276
    %vm278 = vcmp.eq.f32.partialorder %v236, 2.0
    %v279 = vsel %vm278, 1, 0
    %v280 = vlaneseq
    %v281 = vshrl.u32 %v280, 7
    %v282 = vsub.s32 0, %v281
    %v283 = vrot.slane %v279, %v282
    %vm284 = vcmp.eq.s32.totalorder %v283, 1
    %v285 = vsel %vm284, %v231, -1e+30
    %v286 = vsel %vm245, %v285, -inf
    %287 = vmax.xlane.f32.xlu0 %v286
    %v288 = vpop.xlane.xlu0 %287
    %v289 = vcvt.s32.f32 %v279
    %v291 = vlaneseq
    %v292 = vshrl.u32 %v291, 7
    %v293 = vsub.s32 0, %v292
    %v294 = vrot.slane %v289, %v293
    %v296 = vmul.f32 %v294, %v288
    %v297 = vadd.f32 %v277, %v296
    %vm298 = vcmp.eq.f32.partialorder %v236, 3.0
    %v299 = vsel %vm298, 1, 0
    %v300 = vlaneseq
    %v301 = vshrl.u32 %v300, 7
    %v302 = vsub.s32 0, %v301
    %v303 = vrot.slane %v299, %v302
    %vm304 = vcmp.eq.s32.totalorder %v303, 1
    %v305 = vsel %vm304, %v231, -1e+30
    %v306 = vsel %vm245, %v305, -inf
    %307 = vmax.xlane.f32.xlu0 %v306
    %v308 = vpop.xlane.xlu0 %307
    %v309 = vcvt.s32.f32 %v299
    %v311 = vlaneseq
    %v312 = vshrl.u32 %v311, 7
    %v313 = vsub.s32 0, %v312
    %v314 = vrot.slane %v309, %v313
    %v316 = vmul.f32 %v314, %v308
    %v317 = vadd.f32 %v297, %v316
    %v318 = vsub.f32 %v231, %v317
    %v319 = vmul.f32 %v318, 1.442695
    %v320 = vpow.pop %v319
    %v321 = vmul.f32 %v320, %v254
    %v322 = vsel %vm245, %v321, 0.0
    %323 = vadd.xlane.f32.xlu0 %v322
    %v324 = vpop.xlane.xlu0 %323
    %v325 = vrcp.pop %v324
    %v326 = vmul.f32 1.0, %v325
    %v327 = vmul.f32 %v254, %v326
    %v328 = vadd.f32 %v327, 0.0
    %v329 = vmul.f32 %v320, %v274
    %v330 = vsel %vm245, %v329, 0.0
    %331 = vadd.xlane.f32.xlu0 %v330
    %v332 = vpop.xlane.xlu0 %331
    %v333 = vrcp.pop %v332
    %v334 = vmul.f32 1.0, %v333
    %v335 = vmul.f32 %v274, %v334
    %v336 = vadd.f32 %v328, %v335
    %v337 = vmul.f32 %v320, %v294
    %v338 = vsel %vm245, %v337, 0.0
    %339 = vadd.xlane.f32.xlu0 %v338
    %v340 = vpop.xlane.xlu0 %339
    %v341 = vrcp.pop %v340
    %v342 = vmul.f32 1.0, %v341
    %v343 = vmul.f32 %v294, %v342
    %v344 = vadd.f32 %v336, %v343
    %v345 = vmul.f32 %v320, %v314
    %v346 = vsel %vm245, %v345, 0.0
    %347 = vadd.xlane.f32.xlu0 %v346
    %v348 = vpop.xlane.xlu0 %347
    %v349 = vrcp.pop %v348
    %v350 = vmul.f32 1.0, %v349
    %v351 = vmul.f32 %v314, %v350
    %v352 = vadd.f32 %v344, %v351
    %v353 = vmul.f32 %v320, %v352
    %v354 = vpack.c.bf16 %v353, %v353
    %v355 = vld [vmem:[%s5] sm:$0xff]
    %v356 = vld [vmem:[%s5 + $0x8] sm:$0xf]
    %v357 = vld [vmem:[%s5 + $0xc] sm:$0xff]
    %v358 = vld [vmem:[%s5 + $0x14] sm:$0xf]
    %v359 = vld [vmem:[%s5 + $0x18] sm:$0xff]
    %v360 = vld [vmem:[%s5 + $0x20] sm:$0xf]
    %v361 = vld [vmem:[%s5 + $0x24] sm:$0xff]
    %v362 = vld [vmem:[%s5 + $0x2c] sm:$0xf]
    %v363 = vld [vmem:[%s5 + $0x30] sm:$0x33]
    %v364 = vld [vmem:[%s5 + $0x38] sm:$0x3]
    %v375 = vunpack.c.l.b16 %v355
    %v376 = vunpack.c.h.b16 %v355
    %v377 = vunpack.c.l.b16 %v356
    %v378 = vunpack.c.l.b16 %v357
    %v379 = vunpack.c.h.b16 %v357
    %v380 = vunpack.c.l.b16 %v358
    %v381 = vunpack.c.l.b16 %v359
    %v382 = vunpack.c.h.b16 %v359
    %v383 = vunpack.c.l.b16 %v360
    %v384 = vunpack.c.l.b16 %v361
    %v385 = vunpack.c.h.b16 %v361
    %v386 = vunpack.c.l.b16 %v362
    %v387 = vunpack.c.l.b16 %v363
    %v388 = vunpack.c.h.b16 %v363
    %v389 = vunpack.c.l.b16 %v364
    %v390 = vpack.c.b16 %v378, %v375
    %v391 = vpack.c.b16 %v379, %v376
    %v392 = vpack.c.b16 %v380, %v377
    %v393 = vpack.c.b16 %v384, %v381
    %v394 = vpack.c.b16 %v385, %v382
    %v395 = vpack.c.b16 %v386, %v383
    %v396 = vpack.c.b16 %v387, %v387
    %v397 = vpack.c.b16 %v388, %v388
    %v398 = vpack.c.b16 %v389, %v389
    %vm405 = vcmask 293888
    %v407 = vsel %vm405, %v354, 0
    %vm409 = vcmask 1041408
    %v411 = vsel %vm409, %v396, 0
    %v414 = vsel %vm409, %v397, 0
    %v417 = vsel %vm409, %v398, 0
    %419 = vmatprep.subr.bf16.mxu0 0
    %420 = vmatpush1.bf16.msra.mxu0 0
    %421 = vmatprep.subr.bf16.mxu0 0
    %422 = vmatpush1.bf16.msra.mxu0 0
    %423 = vmatprep.subr.bf16.mxu0 0
    %424 = vmatpush1.bf16.msra.mxu0 0
    %425 = vmatprep.subr.bf16.mxu0 0
    %426 = vmatpush1.bf16.msra.mxu0 0
    %427 = vmatprep.subr.bf16.mxu0 0
    %428 = vmatpush1.bf16.msra.mxu0 0
    %429 = vmatprep.subr.bf16.mxu0 %v414
    %430 = vmatpush1.bf16.msra.mxu0 %v411
    %431 = vmatprep.subr.bf16.mxu0 %v394
    %432 = vmatpush1.bf16.msra.mxu0 %v393
    %433 = vmatprep.subr.bf16.mxu0 %v391
    %434 = vmatpush1.bf16.msra.mxu0 %v390
    %435 = vmatprep.subr.bf16.mxu0 0
    %436 = vmatpush2.bf16.msra.mxu0 0
    %437 = vmatprep.subr.bf16.mxu0 0
    %438 = vmatpush2.bf16.msra.mxu0 0
    %439 = vmatprep.subr.bf16.mxu0 0
    %440 = vmatpush2.bf16.msra.mxu0 0
    %441 = vmatprep.subr.bf16.mxu0 0
    %442 = vmatpush2.bf16.msra.mxu0 0
    %443 = vmatprep.subr.bf16.mxu0 0
    %444 = vmatpush2.bf16.msra.mxu0 0
    %445 = vmatprep.subr.bf16.mxu0 0
    %446 = vmatpush2.bf16.msra.mxu0 0
    %447 = vmatprep.subr.bf16.mxu0 0
    %448 = vmatpush2.bf16.msra.mxu0 0
    %449 = vmatprep.subr.bf16.mxu0 0
    %450 = vmatpush2.bf16.msra.mxu0 0
    %451 = vmatprep.mubr.bf16.mxu0 0
    %452 = vmatmul.mubr.bf16.gmra.mxu0 %v407
    %v453 = vpop.f32.mrf.mxu0
    %v454 = vadd.f32 0.0, %v453
    %v455 = vpop.f32.mrf.mxu0
    %v456 = vadd.f32 0.0, %v455
    %v457 = vpop.f32.mrf.mxu0
    %v458 = vpop.f32.mrf.mxu0
    %459 = vdwg.mxu0
    %460 = vmatprep.subr.bf16.mxu0 0
    %461 = vmatpush1.bf16.msra.mxu0 0
    %462 = vmatprep.subr.bf16.mxu0 0
    %463 = vmatpush1.bf16.msra.mxu0 0
    %464 = vmatprep.subr.bf16.mxu0 0
    %465 = vmatpush1.bf16.msra.mxu0 0
    %466 = vmatprep.subr.bf16.mxu0 0
    %467 = vmatpush1.bf16.msra.mxu0 0
    %468 = vmatprep.subr.bf16.mxu0 0
    %469 = vmatpush1.bf16.msra.mxu0 0
    %470 = vmatprep.subr.bf16.mxu0 0
    %471 = vmatpush1.bf16.msra.mxu0 %v417
    %472 = vmatprep.subr.bf16.mxu0 0
    %473 = vmatpush1.bf16.msra.mxu0 %v395
    %474 = vmatprep.subr.bf16.mxu0 0
    %475 = vmatpush1.bf16.msra.mxu0 %v392
    %476 = vmatprep.subr.bf16.mxu0 0
    %477 = vmatpush2.bf16.msra.mxu0 0
    %478 = vmatprep.subr.bf16.mxu0 0
    %479 = vmatpush2.bf16.msra.mxu0 0
    %480 = vmatprep.subr.bf16.mxu0 0
    %481 = vmatpush2.bf16.msra.mxu0 0
    %482 = vmatprep.subr.bf16.mxu0 0
    %483 = vmatpush2.bf16.msra.mxu0 0
    %484 = vmatprep.subr.bf16.mxu0 0
    %485 = vmatpush2.bf16.msra.mxu0 0
    %486 = vmatprep.subr.bf16.mxu0 0
    %487 = vmatpush2.bf16.msra.mxu0 0
    %488 = vmatprep.subr.bf16.mxu0 0
    %489 = vmatpush2.bf16.msra.mxu0 0
    %490 = vmatprep.subr.bf16.mxu0 0
    %491 = vmatpush2.bf16.msra.mxu0 0
    %492 = vmatprep.mubr.bf16.mxu0 0
    %493 = vmatmul.mubr.bf16.gmra.mxu0 %v407
    %v494 = vpop.f32.mrf.mxu0
    %v495 = vadd.f32 0.0, %v494
    %v496 = vpop.f32.mrf.mxu0
    %v497 = vpop.f32.mrf.mxu0
    %v498 = vpop.f32.mrf.mxu0
    %499 = vdwg.mxu0
    %v500 = vunpack.c.l.bf16 %v35
    %v503 = vunpack.c.l.s4 1983009808
    %v504 = vunpack.c.0.s8 %v503
    %v505 = vlaneseq
    %v506 = vshrl.u32 %v505, 7
    %v507 = vsub.s32 %v504, %v506
    %v508 = vrot.slane %v500, %v507
    %v509 = vcombine.high %v508, %v508
    %v512 = vmul.f32 %v454, %v508
    %v513 = vmul.f32 %v456, %v509
    %v514 = vpack.c.bf16 %v512, %v512
    %v515 = vpack.c.bf16 %v513, %v513
    %v516 = vld [vmem:[%s6] sm:$0xf]
    %v517 = vld [vmem:[%s6 + $0x4] sm:$0xf]
    %v518 = vld [vmem:[%s6 + $0x8] sm:$0xf]
    %v519 = vld [vmem:[%s6 + $0xc] sm:$0xf]
    %v520 = vld [vmem:[%s6 + $0x10] sm:$0xf]
    %v521 = vld [vmem:[%s6 + $0x14] sm:$0xf]
    %v522 = vld [vmem:[%s6 + $0x18] sm:$0xf]
    %v523 = vld [vmem:[%s6 + $0x1c] sm:$0xf]
    %v524 = vld [vmem:[%s6 + $0x20] sm:$0xf]
    %v525 = vld [vmem:[%s6 + $0x24] sm:$0xf]
    %v526 = vld [vmem:[%s6 + $0x28] sm:$0xf]
    %v527 = vld [vmem:[%s6 + $0x2c] sm:$0xf]
    %v528 = vld [vmem:[%s6 + $0x30] sm:$0xf]
    %v529 = vld [vmem:[%s6 + $0x34] sm:$0xf]
    %v530 = vld [vmem:[%s6 + $0x38] sm:$0xf]
    %v531 = vld [vmem:[%s6 + $0x3c] sm:$0xf]
    %v532 = vld [vmem:[%s6 + $0x40] sm:$0xf]
    %v533 = vld [vmem:[%s6 + $0x44] sm:$0xf]
    %v534 = vld [vmem:[%s6 + $0x48] sm:$0xf]
    %v535 = vld [vmem:[%s6 + $0x4c] sm:$0xf]
    %v536 = vld [vmem:[%s6 + $0x50] sm:$0xf]
    %v537 = vld [vmem:[%s6 + $0x54] sm:$0xf]
    %v538 = vld [vmem:[%s6 + $0x58] sm:$0xf]
    %v539 = vld [vmem:[%s6 + $0x5c] sm:$0xf]
    %v540 = vld [vmem:[%s6 + $0x60] sm:$0xf]
    %v541 = vld [vmem:[%s6 + $0x64] sm:$0xf]
    %v542 = vld [vmem:[%s6 + $0x68] sm:$0xf]
    %v543 = vld [vmem:[%s6 + $0x6c] sm:$0xf]
    %v544 = vld [vmem:[%s6 + $0x70] sm:$0xf]
    %v545 = vld [vmem:[%s6 + $0x74] sm:$0xf]
    %v546 = vld [vmem:[%s6 + $0x78] sm:$0xf]
    %v547 = vld [vmem:[%s6 + $0x7c] sm:$0xf]
    %v580 = vunpack.c.l.b16 %v516
    %v581 = vunpack.c.l.b16 %v517
    %v582 = vunpack.c.l.b16 %v518
    %v583 = vunpack.c.l.b16 %v519
    %v584 = vunpack.c.l.b16 %v520
    %v585 = vunpack.c.l.b16 %v521
    %v586 = vunpack.c.l.b16 %v522
    %v587 = vunpack.c.l.b16 %v523
    %v588 = vunpack.c.l.b16 %v524
    %v589 = vunpack.c.l.b16 %v525
    %v590 = vunpack.c.l.b16 %v526
    %v591 = vunpack.c.l.b16 %v527
    %v592 = vunpack.c.l.b16 %v528
    %v593 = vunpack.c.l.b16 %v529
    %v594 = vunpack.c.l.b16 %v530
    %v595 = vunpack.c.l.b16 %v531
    %v596 = vunpack.c.l.b16 %v532
    %v597 = vunpack.c.l.b16 %v533
    %v598 = vunpack.c.l.b16 %v534
    %v599 = vunpack.c.l.b16 %v535
    %v600 = vunpack.c.l.b16 %v536
    %v601 = vunpack.c.l.b16 %v537
    %v602 = vunpack.c.l.b16 %v538
    %v603 = vunpack.c.l.b16 %v539
    %v604 = vunpack.c.l.b16 %v540
    %v605 = vunpack.c.l.b16 %v541
    %v606 = vunpack.c.l.b16 %v542
    %v607 = vunpack.c.l.b16 %v543
    %v608 = vunpack.c.l.b16 %v544
    %v609 = vunpack.c.l.b16 %v545
    %v610 = vunpack.c.l.b16 %v546
    %v611 = vunpack.c.l.b16 %v547
    %v612 = vpack.c.b16 %v581, %v580
    %v613 = vpack.c.b16 %v583, %v582
    %v614 = vpack.c.b16 %v585, %v584
    %v615 = vpack.c.b16 %v587, %v586
    %v616 = vpack.c.b16 %v589, %v588
    %v617 = vpack.c.b16 %v591, %v590
    %v618 = vpack.c.b16 %v593, %v592
    %v619 = vpack.c.b16 %v595, %v594
    %v620 = vpack.c.b16 %v597, %v596
    %v621 = vpack.c.b16 %v599, %v598
    %v622 = vpack.c.b16 %v601, %v600
    %v623 = vpack.c.b16 %v603, %v602
    %v624 = vpack.c.b16 %v605, %v604
    %v625 = vpack.c.b16 %v607, %v606
    %v626 = vpack.c.b16 %v609, %v608
    %v627 = vpack.c.b16 %v611, %v610
    %644 = vmatprep.subr.bf16.mxu0 0
    %645 = vmatpush1.bf16.msra.mxu0 %v619
    %646 = vmatprep.subr.bf16.mxu0 0
    %647 = vmatpush1.bf16.msra.mxu0 %v618
    %648 = vmatprep.subr.bf16.mxu0 0
    %649 = vmatpush1.bf16.msra.mxu0 %v617
    %650 = vmatprep.subr.bf16.mxu0 0
    %651 = vmatpush1.bf16.msra.mxu0 %v616
    %652 = vmatprep.subr.bf16.mxu0 0
    %653 = vmatpush1.bf16.msra.mxu0 %v615
    %654 = vmatprep.subr.bf16.mxu0 0
    %655 = vmatpush1.bf16.msra.mxu0 %v614
    %656 = vmatprep.subr.bf16.mxu0 0
    %657 = vmatpush1.bf16.msra.mxu0 %v613
    %658 = vmatprep.subr.bf16.mxu0 0
    %659 = vmatpush1.bf16.msra.mxu0 %v612
    %660 = vmatprep.subr.bf16.mxu0 0
    %661 = vmatpush2.bf16.msra.mxu0 %v627
    %662 = vmatprep.subr.bf16.mxu0 0
    %663 = vmatpush2.bf16.msra.mxu0 %v626
    %664 = vmatprep.subr.bf16.mxu0 0
    %665 = vmatpush2.bf16.msra.mxu0 %v625
    %666 = vmatprep.subr.bf16.mxu0 0
    %667 = vmatpush2.bf16.msra.mxu0 %v624
    %668 = vmatprep.subr.bf16.mxu0 0
    %669 = vmatpush2.bf16.msra.mxu0 %v623
    %670 = vmatprep.subr.bf16.mxu0 0
    %671 = vmatpush2.bf16.msra.mxu0 %v622
    %672 = vmatprep.subr.bf16.mxu0 0
    %673 = vmatpush2.bf16.msra.mxu0 %v621
    %674 = vmatprep.subr.bf16.mxu0 0
    %675 = vmatpush2.bf16.msra.mxu0 %v620
    %676 = vmatprep.mubr.bf16.mxu0 %v515
    %677 = vmatmul.mubr.bf16.gmra.mxu0 %v514
    %v678 = vpop.f32.mrf.mxu0
    %v679 = vadd.f32 %v495, %v678
    %v680 = vpop.f32.mrf.mxu0
    %v681 = vpop.f32.mrf.mxu0
    %v682 = vpop.f32.mrf.mxu0
    %683 = vdwg.mxu0
    %vm684 = vcmask 254976
    %v685 = vsel %vm684, %v679, 0.0
    %686 = vadd.xlane.f32.xlu0 %v685
    %v687 = vpop.xlane.xlu0 %686
    %v688 = vrcp.pop 32.0
    %v689 = vmul.f32 %v687, %v688
    %v690 = vsub.f32 %v679, %v689
    %v691 = vmul.f32 %v690, %v690
    %v692 = vsel %vm684, %v691, 0.0
    %693 = vadd.xlane.f32.xlu0 %v692
    %v694 = vpop.xlane.xlu0 %693
    %v695 = vmul.f32 %v694, %v688
    %v696 = vadd.f32 %v695, 1e-05
    %v697 = vrsqrt.pop %v696
    %v698 = vmul.f32 %v690, %v697
    %v699 = vld [vmem:[%s7] sm:$0x1]
    %v701 = vlaneseq
    %v702 = vshrl.u32 %v701, 7
    %v703 = vsub.s32 0, %v702
    %v704 = vrot.slane %v699, %v703
    %v706 = vmul.f32 %v698, %v704
    %v707 = vld [vmem:[%s8] sm:$0x1]
    %v709 = vlaneseq
    %v710 = vshrl.u32 %v709, 7
    %v711 = vsub.s32 0, %v710
    %v712 = vrot.slane %v707, %v711
    %v714 = vadd.f32 %v706, %v712
    %715 = vst.msk [vmem:[#allocation2] sm:$0x3] %vm684, %v714
    // Predicated region
    $region38: #{tpu_custom_call.1} parent=1 // pred_check
      _
    $region39: #{tpu_custom_call.1} parent=1 // pred_check_branch
      %717 = sbr.rel (0) target = $region41
    $region40: #{tpu_custom_call.1} parent=1 // pred_region
      %s719 = ssub.s32 32, 32
      %720 = vsyncadd [#allocation3], %s719
      %s722 = sshll.u32 [#allocation2], 4
      %s723 = int_to_ptr.vmem [resolvable:$true] %s722
      %725 = dma.vmem_to_hbm [thread:$0]  %s723, 32, %s9, [#allocation3]
    $region41: #{tpu_custom_call.1} parent=1 // pred_fallthru
      _
    // Predicated region
    $region42: #{tpu_custom_call.1} parent=1 // pred_check
      _
    $region43: #{tpu_custom_call.1} parent=1 // pred_check_branch
      %727 = sbr.rel (0) target = $region45
    $region44: #{tpu_custom_call.1} parent=1 // pred_region
      %728 = dma.done [#allocation3], 32
    $region45: #{tpu_custom_call.1} parent=1 // pred_fallthru
      _
    %729 = vsyncpa [#allocation3], 1

// kernel: tpu_custom_call.1
$region0: #{tpu_custom_call.1}
  #allocation0 [shape = 'u32[]', space=smem, size = 0x4, offset = 0x4, fixed_abs, tag = 'smem constant byte address 0x4 - core index']
  #allocation1 [shape = 'u32[144,128]{1,0:T(1,128)}', space=vmem, size = 0x12000, scoped, tag = 'internal scratch']
  %s0 = inlined_call_operand.vmem [shape: bf16[2,256], index: 0, kind: input, shape index: {}]
  %s1 = inlined_call_operand.vmem [shape: bf16[2,256], index: 1, kind: input, shape index: {}]
  %s2 = inlined_call_operand.vmem [shape: bf16[256,36], index: 2, kind: input, shape index: {}]
  %s3 = inlined_call_operand.vmem [shape: f32[1,36], index: 3, kind: input, shape index: {}]
  %s4 = inlined_call_operand.vmem [shape: f32[1,36], index: 4, kind: input, shape index: {}]
  %s5 = inlined_call_operand.vmem [shape: bf16[36,288], index: 5, kind: input, shape index: {}]
  %s6 = inlined_call_operand.vmem [shape: bf16[256,32], index: 6, kind: input, shape index: {}]
  %s7 = inlined_call_operand.vmem [shape: f32[1,32], index: 7, kind: input, shape index: {}]
  %s8 = inlined_call_operand.vmem [shape: f32[1,32], index: 8, kind: input, shape index: {}]
  %s9 = inlined_call_operand.hbm [shape: f32[2,32], index: 9, kind: output, shape index: {}]
  %s10 = sld [smem:[#allocation0]]
  $region46: #{tpu_custom_call.1} parent=0
    _
  %s12 = ssub.s32 1, %s10
  %s13 = scalar_select 0, %s12, %s10
  $region1: #{tpu_custom_call.1} parent=0
    #allocation2 [shape = 'u8[1024]{0}', space=vmem, size = 0x400, scoped, tag = 'output window, operand 0, single buffered']
    #allocation3 [shape = 's32[1]{0}', space=sflag, size = 0x4, scoped, tag = 'scoped memory for tpu_custom_call.1']
    %14 = vsyncpa [#allocation3], 0
    // Predicated region
    $region2: #{tpu_custom_call.1} parent=1 // pred_check
      _
    $region3: #{tpu_custom_call.1} parent=1 // pred_check_branch
      %16 = sbr.rel (0) target = $region5
    $region4: #{tpu_custom_call.1} parent=1 // pred_region
      _
    $region5: #{tpu_custom_call.1} parent=1 // pred_fallthru
      _
    // Predicated region
    $region6: #{tpu_custom_call.1} parent=1 // pred_check
      _
    $region7: #{tpu_custom_call.1} parent=1 // pred_check_branch
      %18 = sbr.rel (0) target = $region9
    $region8: #{tpu_custom_call.1} parent=1 // pred_region
      _
    $region9: #{tpu_custom_call.1} parent=1 // pred_fallthru
      _
    // Predicated region
    $region10: #{tpu_custom_call.1} parent=1 // pred_check
      _
    $region11: #{tpu_custom_call.1} parent=1 // pred_check_branch
      %20 = sbr.rel (0) target = $region13
    $region12: #{tpu_custom_call.1} parent=1 // pred_region
      _
    $region13: #{tpu_custom_call.1} parent=1 // pred_fallthru
      _
    // Predicated region
    $region14: #{tpu_custom_call.1} parent=1 // pred_check
      _
    $region15: #{tpu_custom_call.1} parent=1 // pred_check_branch
      %22 = sbr.rel (0) target = $region17
    $region16: #{tpu_custom_call.1} parent=1 // pred_region
      _
    $region17: #{tpu_custom_call.1} parent=1 // pred_fallthru
      _
    // Predicated region
    $region18: #{tpu_custom_call.1} parent=1 // pred_check
      _
    $region19: #{tpu_custom_call.1} parent=1 // pred_check_branch
      %24 = sbr.rel (0) target = $region21
    $region20: #{tpu_custom_call.1} parent=1 // pred_region
      _
    $region21: #{tpu_custom_call.1} parent=1 // pred_fallthru
      _
    // Predicated region
    $region22: #{tpu_custom_call.1} parent=1 // pred_check
      _
    $region23: #{tpu_custom_call.1} parent=1 // pred_check_branch
      %26 = sbr.rel (0) target = $region25
    $region24: #{tpu_custom_call.1} parent=1 // pred_region
      _
    $region25: #{tpu_custom_call.1} parent=1 // pred_fallthru
      _
    // Predicated region
    $region26: #{tpu_custom_call.1} parent=1 // pred_check
      _
    $region27: #{tpu_custom_call.1} parent=1 // pred_check_branch
      %28 = sbr.rel (0) target = $region29
    $region28: #{tpu_custom_call.1} parent=1 // pred_region
      _
    $region29: #{tpu_custom_call.1} parent=1 // pred_fallthru
      _
    // Predicated region
    $region30: #{tpu_custom_call.1} parent=1 // pred_check
      _
    $region31: #{tpu_custom_call.1} parent=1 // pred_check_branch
      %30 = sbr.rel (0) target = $region33
    $region32: #{tpu_custom_call.1} parent=1 // pred_region
      _
    $region33: #{tpu_custom_call.1} parent=1 // pred_fallthru
      _
    // Predicated region
    $region34: #{tpu_custom_call.1} parent=1 // pred_check
      _
    $region35: #{tpu_custom_call.1} parent=1 // pred_check_branch
      %32 = sbr.rel (0) target = $region37
    $region36: #{tpu_custom_call.1} parent=1 // pred_region
      _
    $region37: #{tpu_custom_call.1} parent=1 // pred_fallthru
      _
    %v34 = vld [vmem:[%s0] sm:$0x3]
    %v35 = vld [vmem:[%s1] sm:$0x3]
    %v36 = vld [vmem:[%s2] sm:$0xf]
    %v37 = vld [vmem:[%s2 + $0x4] sm:$0xf]
    %v38 = vld [vmem:[%s2 + $0x8] sm:$0xf]
    %v39 = vld [vmem:[%s2 + $0xc] sm:$0xf]
    %v40 = vld [vmem:[%s2 + $0x10] sm:$0xf]
    %v41 = vld [vmem:[%s2 + $0x14] sm:$0xf]
    %v42 = vld [vmem:[%s2 + $0x18] sm:$0xf]
    %v43 = vld [vmem:[%s2 + $0x1c] sm:$0xf]
    %v44 = vld [vmem:[%s2 + $0x20] sm:$0xf]
    %v45 = vld [vmem:[%s2 + $0x24] sm:$0xf]
    %v46 = vld [vmem:[%s2 + $0x28] sm:$0xf]
    %v47 = vld [vmem:[%s2 + $0x2c] sm:$0xf]
    %v48 = vld [vmem:[%s2 + $0x30] sm:$0xf]
    %v49 = vld [vmem:[%s2 + $0x34] sm:$0xf]
    %v50 = vld [vmem:[%s2 + $0x38] sm:$0xf]
    %v51 = vld [vmem:[%s2 + $0x3c] sm:$0xf]
    %v52 = vld [vmem:[%s2 + $0x40] sm:$0xf]
    %v53 = vld [vmem:[%s2 + $0x44] sm:$0xf]
    %v54 = vld [vmem:[%s2 + $0x48] sm:$0xf]
    %v55 = vld [vmem:[%s2 + $0x4c] sm:$0xf]
    %v56 = vld [vmem:[%s2 + $0x50] sm:$0xf]
    %v57 = vld [vmem:[%s2 + $0x54] sm:$0xf]
    %v58 = vld [vmem:[%s2 + $0x58] sm:$0xf]
    %v59 = vld [vmem:[%s2 + $0x5c] sm:$0xf]
    %v60 = vld [vmem:[%s2 + $0x60] sm:$0xf]
    %v61 = vld [vmem:[%s2 + $0x64] sm:$0xf]
    %v62 = vld [vmem:[%s2 + $0x68] sm:$0xf]
    %v63 = vld [vmem:[%s2 + $0x6c] sm:$0xf]
    %v64 = vld [vmem:[%s2 + $0x70] sm:$0xf]
    %v65 = vld [vmem:[%s2 + $0x74] sm:$0xf]
    %v66 = vld [vmem:[%s2 + $0x78] sm:$0xf]
    %v67 = vld [vmem:[%s2 + $0x7c] sm:$0xf]
    %v68 = vld [vmem:[%s3] sm:$0x1]
    %v70 = vlaneseq
    %v71 = vshrl.u32 %v70, 7
    %v72 = vsub.s32 0, %v71
    %v73 = vrot.slane %v68, %v72
    %v77 = vunpack.c.l.s4 1966171168
    %v78 = vunpack.c.0.s8 %v77
    %v79 = vlaneseq
    %v80 = vshrl.u32 %v79, 7
    %v81 = vsub.s32 %v78, %v80
    %v82 = vrot.slane %v34, %v81
    %v83 = vcombine.high %v82, %v82
    %v85 = vunpack.c.l.s4 1966171168
    %v86 = vunpack.c.0.s8 %v85
    %v87 = vlaneseq
    %v88 = vshrl.u32 %v87, 7
    %v89 = vsub.s32 %v86, %v88
    %v90 = vrot.slane %v82, %v89
    %v92 = vunpack.c.l.s4 1966171168
    %v93 = vunpack.c.0.s8 %v92
    %v94 = vlaneseq
    %v95 = vshrl.u32 %v94, 7
    %v96 = vsub.s32 %v93, %v95
    %v97 = vrot.slane %v83, %v96
    %v132 = vunpack.c.l.b16 %v36
    %v133 = vunpack.c.l.b16 %v37
    %v134 = vunpack.c.l.b16 %v38
    %v135 = vunpack.c.l.b16 %v39
    %v136 = vunpack.c.l.b16 %v40
    %v137 = vunpack.c.l.b16 %v41
    %v138 = vunpack.c.l.b16 %v42
    %v139 = vunpack.c.l.b16 %v43
    %v140 = vunpack.c.l.b16 %v44
    %v141 = vunpack.c.l.b16 %v45
    %v142 = vunpack.c.l.b16 %v46
    %v143 = vunpack.c.l.b16 %v47
    %v144 = vunpack.c.l.b16 %v48
    %v145 = vunpack.c.l.b16 %v49
    %v146 = vunpack.c.l.b16 %v50
    %v147 = vunpack.c.l.b16 %v51
    %v148 = vunpack.c.l.b16 %v52
    %v149 = vunpack.c.l.b16 %v53
    %v150 = vunpack.c.l.b16 %v54
    %v151 = vunpack.c.l.b16 %v55
    %v152 = vunpack.c.l.b16 %v56
    %v153 = vunpack.c.l.b16 %v57
    %v154 = vunpack.c.l.b16 %v58
    %v155 = vunpack.c.l.b16 %v59
    %v156 = vunpack.c.l.b16 %v60
    %v157 = vunpack.c.l.b16 %v61
    %v158 = vunpack.c.l.b16 %v62
    %v159 = vunpack.c.l.b16 %v63
    %v160 = vunpack.c.l.b16 %v64
    %v161 = vunpack.c.l.b16 %v65
    %v162 = vunpack.c.l.b16 %v66
    %v163 = vunpack.c.l.b16 %v67
    %v164 = vpack.c.b16 %v133, %v132
    %v165 = vpack.c.b16 %v135, %v134
    %v166 = vpack.c.b16 %v137, %v136
    %v167 = vpack.c.b16 %v139, %v138
    %v168 = vpack.c.b16 %v141, %v140
    %v169 = vpack.c.b16 %v143, %v142
    %v170 = vpack.c.b16 %v145, %v144
    %v171 = vpack.c.b16 %v147, %v146
    %v172 = vpack.c.b16 %v149, %v148
    %v173 = vpack.c.b16 %v151, %v150
    %v174 = vpack.c.b16 %v153, %v152
    %v175 = vpack.c.b16 %v155, %v154
    %v176 = vpack.c.b16 %v157, %v156
    %v177 = vpack.c.b16 %v159, %v158
    %v178 = vpack.c.b16 %v161, %v160
    %v179 = vpack.c.b16 %v163, %v162
    %196 = vmatprep.subr.bf16.mxu0 0
    %197 = vmatpush1.bf16.msra.mxu0 %v171
    %198 = vmatprep.subr.bf16.mxu0 0
    %199 = vmatpush1.bf16.msra.mxu0 %v170
    %200 = vmatprep.subr.bf16.mxu0 0
    %201 = vmatpush1.bf16.msra.mxu0 %v169
    %202 = vmatprep.subr.bf16.mxu0 0
    %203 = vmatpush1.bf16.msra.mxu0 %v168
    %204 = vmatprep.subr.bf16.mxu0 0
    %205 = vmatpush1.bf16.msra.mxu0 %v167
    %206 = vmatprep.subr.bf16.mxu0 0
    %207 = vmatpush1.bf16.msra.mxu0 %v166
    %208 = vmatprep.subr.bf16.mxu0 0
    %209 = vmatpush1.bf16.msra.mxu0 %v165
    %210 = vmatprep.subr.bf16.mxu0 0
    %211 = vmatpush1.bf16.msra.mxu0 %v164
    %212 = vmatprep.subr.bf16.mxu0 0
    %213 = vmatpush2.bf16.msra.mxu0 %v179
    %214 = vmatprep.subr.bf16.mxu0 0
    %215 = vmatpush2.bf16.msra.mxu0 %v178
    %216 = vmatprep.subr.bf16.mxu0 0
    %217 = vmatpush2.bf16.msra.mxu0 %v177
    %218 = vmatprep.subr.bf16.mxu0 0
    %219 = vmatpush2.bf16.msra.mxu0 %v176
    %220 = vmatprep.subr.bf16.mxu0 0
    %221 = vmatpush2.bf16.msra.mxu0 %v175
    %222 = vmatprep.subr.bf16.mxu0 0
    %223 = vmatpush2.bf16.msra.mxu0 %v174
    %224 = vmatprep.subr.bf16.mxu0 0
    %225 = vmatpush2.bf16.msra.mxu0 %v173
    %226 = vmatprep.subr.bf16.mxu0 0
    %227 = vmatpush2.bf16.msra.mxu0 %v172
    %228 = vmatprep.mubr.bf16.mxu0 %v97
    %229 = vmatmul.mubr.bf16.gmra.mxu0 %v90
    %v230 = vpop.f32.mrf.mxu0
    %v231 = vadd.f32 %v73, %v230
    %v232 = vpop.f32.mrf.mxu0
    %v233 = vpop.f32.mrf.mxu0
    %v234 = vpop.f32.mrf.mxu0
    %235 = vdwg.mxu0
    %v236 = vld [vmem:[%s4] sm:$0x1]
    %vm237 = vcmp.eq.f32.partialorder %v236, 0.0
    %v238 = vsel %vm237, 1, 0
    %v239 = vlaneseq
    %v240 = vshrl.u32 %v239, 7
    %v241 = vsub.s32 0, %v240
    %v242 = vrot.slane %v238, %v241
    %vm243 = vcmp.eq.s32.totalorder %v242, 1
    %v244 = vsel %vm243, %v231, -1e+30
    %vm245 = vcmask 287744
    %v246 = vsel %vm245, %v244, -inf
    %247 = vmax.xlane.f32.xlu0 %v246
    %v248 = vpop.xlane.xlu0 %247
    %v249 = vcvt.s32.f32 %v238
    %v251 = vlaneseq
    %v252 = vshrl.u32 %v251, 7
    %v253 = vsub.s32 0, %v252
    %v254 = vrot.slane %v249, %v253
    %v256 = vmul.f32 %v254, %v248
    %v257 = vadd.f32 %v256, 0.0
    %vm258 = vcmp.eq.f32.partialorder %v236, 1.0
    %v259 = vsel %vm258, 1, 0
    %v260 = vlaneseq
    %v261 = vshrl.u32 %v260, 7
    %v262 = vsub.s32 0, %v261
    %v263 = vrot.slane %v259, %v262
    %vm264 = vcmp.eq.s32.totalorder %v263, 1
    %v265 = vsel %vm264, %v231, -1e+30
    %v266 = vsel %vm245, %v265, -inf
    %267 = vmax.xlane.f32.xlu0 %v266
    %v268 = vpop.xlane.xlu0 %267
    %v269 = vcvt.s32.f32 %v259
    %v271 = vlaneseq
    %v272 = vshrl.u32 %v271, 7
    %v273 = vsub.s32 0, %v272
    %v274 = vrot.slane %v269, %v273
    %v276 = vmul.f32 %v274, %v268
    %v277 = vadd.f32 %v257, %v276
    %vm278 = vcmp.eq.f32.partialorder %v236, 2.0
    %v279 = vsel %vm278, 1, 0
    %v280 = vlaneseq
    %v281 = vshrl.u32 %v280, 7
    %v282 = vsub.s32 0, %v281
    %v283 = vrot.slane %v279, %v282
    %vm284 = vcmp.eq.s32.totalorder %v283, 1
    %v285 = vsel %vm284, %v231, -1e+30
    %v286 = vsel %vm245, %v285, -inf
    %287 = vmax.xlane.f32.xlu0 %v286
    %v288 = vpop.xlane.xlu0 %287
    %v289 = vcvt.s32.f32 %v279
    %v291 = vlaneseq
    %v292 = vshrl.u32 %v291, 7
    %v293 = vsub.s32 0, %v292
    %v294 = vrot.slane %v289, %v293
    %v296 = vmul.f32 %v294, %v288
    %v297 = vadd.f32 %v277, %v296
    %vm298 = vcmp.eq.f32.partialorder %v236, 3.0
    %v299 = vsel %vm298, 1, 0
    %v300 = vlaneseq
    %v301 = vshrl.u32 %v300, 7
    %v302 = vsub.s32 0, %v301
    %v303 = vrot.slane %v299, %v302
    %vm304 = vcmp.eq.s32.totalorder %v303, 1
    %v305 = vsel %vm304, %v231, -1e+30
    %v306 = vsel %vm245, %v305, -inf
    %307 = vmax.xlane.f32.xlu0 %v306
    %v308 = vpop.xlane.xlu0 %307
    %v309 = vcvt.s32.f32 %v299
    %v311 = vlaneseq
    %v312 = vshrl.u32 %v311, 7
    %v313 = vsub.s32 0, %v312
    %v314 = vrot.slane %v309, %v313
    %v316 = vmul.f32 %v314, %v308
    %v317 = vadd.f32 %v297, %v316
    %v318 = vsub.f32 %v231, %v317
    %v319 = vmul.f32 %v318, 1.442695
    %v320 = vpow.pop %v319
    %v321 = vmul.f32 %v320, %v254
    %v322 = vsel %vm245, %v321, 0.0
    %323 = vadd.xlane.f32.xlu0 %v322
    %v324 = vpop.xlane.xlu0 %323
    %v325 = vrcp.pop %v324
    %v326 = vmul.f32 1.0, %v325
    %v327 = vmul.f32 %v254, %v326
    %v328 = vadd.f32 %v327, 0.0
    %v329 = vmul.f32 %v320, %v274
    %v330 = vsel %vm245, %v329, 0.0
    %331 = vadd.xlane.f32.xlu0 %v330
    %v332 = vpop.xlane.xlu0 %331
    %v333 = vrcp.pop %v332
    %v334 = vmul.f32 1.0, %v333
    %v335 = vmul.f32 %v274, %v334
    %v336 = vadd.f32 %v328, %v335
    %v337 = vmul.f32 %v320, %v294
    %v338 = vsel %vm245, %v337, 0.0
    %339 = vadd.xlane.f32.xlu0 %v338
    %v340 = vpop.xlane.xlu0 %339
    %v341 = vrcp.pop %v340
    %v342 = vmul.f32 1.0, %v341
    %v343 = vmul.f32 %v294, %v342
    %v344 = vadd.f32 %v336, %v343
    %v345 = vmul.f32 %v320, %v314
    %v346 = vsel %vm245, %v345, 0.0
    %347 = vadd.xlane.f32.xlu0 %v346
    %v348 = vpop.xlane.xlu0 %347
    %v349 = vrcp.pop %v348
    %v350 = vmul.f32 1.0, %v349
    %v351 = vmul.f32 %v314, %v350
    %v352 = vadd.f32 %v344, %v351
    %v353 = vmul.f32 %v320, %v352
    %v354 = vpack.c.bf16 %v353, %v353
    %v355 = vld [vmem:[%s5] sm:$0xff]
    %v356 = vld [vmem:[%s5 + $0x8] sm:$0xf]
    %v357 = vld [vmem:[%s5 + $0xc] sm:$0xff]
    %v358 = vld [vmem:[%s5 + $0x14] sm:$0xf]
    %v359 = vld [vmem:[%s5 + $0x18] sm:$0xff]
    %v360 = vld [vmem:[%s5 + $0x20] sm:$0xf]
    %v361 = vld [vmem:[%s5 + $0x24] sm:$0xff]
    %v362 = vld [vmem:[%s5 + $0x2c] sm:$0xf]
    %v363 = vld [vmem:[%s5 + $0x30] sm:$0x33]
    %v364 = vld [vmem:[%s5 + $0x38] sm:$0x3]
    %v375 = vunpack.c.l.b16 %v355
    %v376 = vunpack.c.h.b16 %v355
    %v377 = vunpack.c.l.b16 %v356
    %v378 = vunpack.c.l.b16 %v357
    %v379 = vunpack.c.h.b16 %v357
    %v380 = vunpack.c.l.b16 %v358
    %v381 = vunpack.c.l.b16 %v359
    %v382 = vunpack.c.h.b16 %v359
    %v383 = vunpack.c.l.b16 %v360
    %v384 = vunpack.c.l.b16 %v361
    %v385 = vunpack.c.h.b16 %v361
    %v386 = vunpack.c.l.b16 %v362
    %v387 = vunpack.c.l.b16 %v363
    %v388 = vunpack.c.h.b16 %v363
    %v389 = vunpack.c.l.b16 %v364
    %v390 = vpack.c.b16 %v378, %v375
    %v391 = vpack.c.b16 %v379, %v376
    %v392 = vpack.c.b16 %v380, %v377
    %v393 = vpack.c.b16 %v384, %v381
    %v394 = vpack.c.b16 %v385, %v382
    %v395 = vpack.c.b16 %v386, %v383
    %v396 = vpack.c.b16 %v387, %v387
    %v397 = vpack.c.b16 %v388, %v388
    %v398 = vpack.c.b16 %v389, %v389
    %vm405 = vcmask 293888
    %v407 = vsel %vm405, %v354, 0
    %vm409 = vcmask 1041408
    %v411 = vsel %vm409, %v396, 0
    %v414 = vsel %vm409, %v397, 0
    %v417 = vsel %vm409, %v398, 0
    %419 = vmatprep.subr.bf16.mxu0 0
    %420 = vmatpush1.bf16.msra.mxu0 0
    %421 = vmatprep.subr.bf16.mxu0 0
    %422 = vmatpush1.bf16.msra.mxu0 0
    %423 = vmatprep.subr.bf16.mxu0 0
    %424 = vmatpush1.bf16.msra.mxu0 0
    %425 = vmatprep.subr.bf16.mxu0 0
    %426 = vmatpush1.bf16.msra.mxu0 0
    %427 = vmatprep.subr.bf16.mxu0 0
    %428 = vmatpush1.bf16.msra.mxu0 0
    %429 = vmatprep.subr.bf16.mxu0 %v414
    %430 = vmatpush1.bf16.msra.mxu0 %v411
    %431 = vmatprep.subr.bf16.mxu0 %v394
    %432 = vmatpush1.bf16.msra.mxu0 %v393
    %433 = vmatprep.subr.bf16.mxu0 %v391
    %434 = vmatpush1.bf16.msra.mxu0 %v390
    %435 = vmatprep.subr.bf16.mxu0 0
    %436 = vmatpush2.bf16.msra.mxu0 0
    %437 = vmatprep.subr.bf16.mxu0 0
    %438 = vmatpush2.bf16.msra.mxu0 0
    %439 = vmatprep.subr.bf16.mxu0 0
    %440 = vmatpush2.bf16.msra.mxu0 0
    %441 = vmatprep.subr.bf16.mxu0 0
    %442 = vmatpush2.bf16.msra.mxu0 0
    %443 = vmatprep.subr.bf16.mxu0 0
    %444 = vmatpush2.bf16.msra.mxu0 0
    %445 = vmatprep.subr.bf16.mxu0 0
    %446 = vmatpush2.bf16.msra.mxu0 0
    %447 = vmatprep.subr.bf16.mxu0 0
    %448 = vmatpush2.bf16.msra.mxu0 0
    %449 = vmatprep.subr.bf16.mxu0 0
    %450 = vmatpush2.bf16.msra.mxu0 0
    %451 = vmatprep.mubr.bf16.mxu0 0
    %452 = vmatmul.mubr.bf16.gmra.mxu0 %v407
    %v453 = vpop.f32.mrf.mxu0
    %v454 = vadd.f32 0.0, %v453
    %v455 = vpop.f32.mrf.mxu0
    %v456 = vadd.f32 0.0, %v455
    %v457 = vpop.f32.mrf.mxu0
    %v458 = vpop.f32.mrf.mxu0
    %459 = vdwg.mxu0
    %460 = vmatprep.subr.bf16.mxu0 0
    %461 = vmatpush1.bf16.msra.mxu0 0
    %462 = vmatprep.subr.bf16.mxu0 0
    %463 = vmatpush1.bf16.msra.mxu0 0
    %464 = vmatprep.subr.bf16.mxu0 0
    %465 = vmatpush1.bf16.msra.mxu0 0
    %466 = vmatprep.subr.bf16.mxu0 0
    %467 = vmatpush1.bf16.msra.mxu0 0
    %468 = vmatprep.subr.bf16.mxu0 0
    %469 = vmatpush1.bf16.msra.mxu0 0
    %470 = vmatprep.subr.bf16.mxu0 0
    %471 = vmatpush1.bf16.msra.mxu0 %v417
    %472 = vmatprep.subr.bf16.mxu0 0
    %473 = vmatpush1.bf16.msra.mxu0 %v395
    %474 = vmatprep.subr.bf16.mxu0 0
    %475 = vmatpush1.bf16.msra.mxu0 %v392
    %476 = vmatprep.subr.bf16.mxu0 0
    %477 = vmatpush2.bf16.msra.mxu0 0
    %478 = vmatprep.subr.bf16.mxu0 0
    %479 = vmatpush2.bf16.msra.mxu0 0
    %480 = vmatprep.subr.bf16.mxu0 0
    %481 = vmatpush2.bf16.msra.mxu0 0
    %482 = vmatprep.subr.bf16.mxu0 0
    %483 = vmatpush2.bf16.msra.mxu0 0
    %484 = vmatprep.subr.bf16.mxu0 0
    %485 = vmatpush2.bf16.msra.mxu0 0
    %486 = vmatprep.subr.bf16.mxu0 0
    %487 = vmatpush2.bf16.msra.mxu0 0
    %488 = vmatprep.subr.bf16.mxu0 0
    %489 = vmatpush2.bf16.msra.mxu0 0
    %490 = vmatprep.subr.bf16.mxu0 0
    %491 = vmatpush2.bf16.msra.mxu0 0
    %492 = vmatprep.mubr.bf16.mxu0 0
    %493 = vmatmul.mubr.bf16.gmra.mxu0 %v407
    %v494 = vpop.f32.mrf.mxu0
    %v495 = vadd.f32 0.0, %v494
    %v496 = vpop.f32.mrf.mxu0
    %v497 = vpop.f32.mrf.mxu0
    %v498 = vpop.f32.mrf.mxu0
    %499 = vdwg.mxu0
    %v500 = vunpack.c.l.bf16 %v35
    %v503 = vunpack.c.l.s4 1983009808
    %v504 = vunpack.c.0.s8 %v503
    %v505 = vlaneseq
    %v506 = vshrl.u32 %v505, 7
    %v507 = vsub.s32 %v504, %v506
    %v508 = vrot.slane %v500, %v507
    %v509 = vcombine.high %v508, %v508
    %v512 = vmul.f32 %v454, %v508
    %v513 = vmul.f32 %v456, %v509
    %v514 = vpack.c.bf16 %v512, %v512
    %v515 = vpack.c.bf16 %v513, %v513
    %v516 = vld [vmem:[%s6] sm:$0xf]
    %v517 = vld [vmem:[%s6 + $0x4] sm:$0xf]
    %v518 = vld [vmem:[%s6 + $0x8] sm:$0xf]
    %v519 = vld [vmem:[%s6 + $0xc] sm:$0xf]
    %v520 = vld [vmem:[%s6 + $0x10] sm:$0xf]
    %v521 = vld [vmem:[%s6 + $0x14] sm:$0xf]
    %v522 = vld [vmem:[%s6 + $0x18] sm:$0xf]
    %v523 = vld [vmem:[%s6 + $0x1c] sm:$0xf]
    %v524 = vld [vmem:[%s6 + $0x20] sm:$0xf]
    %v525 = vld [vmem:[%s6 + $0x24] sm:$0xf]
    %v526 = vld [vmem:[%s6 + $0x28] sm:$0xf]
    %v527 = vld [vmem:[%s6 + $0x2c] sm:$0xf]
    %v528 = vld [vmem:[%s6 + $0x30] sm:$0xf]
    %v529 = vld [vmem:[%s6 + $0x34] sm:$0xf]
    %v530 = vld [vmem:[%s6 + $0x38] sm:$0xf]
    %v531 = vld [vmem:[%s6 + $0x3c] sm:$0xf]
    %v532 = vld [vmem:[%s6 + $0x40] sm:$0xf]
    %v533 = vld [vmem:[%s6 + $0x44] sm:$0xf]
    %v534 = vld [vmem:[%s6 + $0x48] sm:$0xf]
    %v535 = vld [vmem:[%s6 + $0x4c] sm:$0xf]
    %v536 = vld [vmem:[%s6 + $0x50] sm:$0xf]
    %v537 = vld [vmem:[%s6 + $0x54] sm:$0xf]
    %v538 = vld [vmem:[%s6 + $0x58] sm:$0xf]
    %v539 = vld [vmem:[%s6 + $0x5c] sm:$0xf]
    %v540 = vld [vmem:[%s6 + $0x60] sm:$0xf]
    %v541 = vld [vmem:[%s6 + $0x64] sm:$0xf]
    %v542 = vld [vmem:[%s6 + $0x68] sm:$0xf]
    %v543 = vld [vmem:[%s6 + $0x6c] sm:$0xf]
    %v544 = vld [vmem:[%s6 + $0x70] sm:$0xf]
    %v545 = vld [vmem:[%s6 + $0x74] sm:$0xf]
    %v546 = vld [vmem:[%s6 + $0x78] sm:$0xf]
    %v547 = vld [vmem:[%s6 + $0x7c] sm:$0xf]
    %v580 = vunpack.c.l.b16 %v516
    %v581 = vunpack.c.l.b16 %v517
    %v582 = vunpack.c.l.b16 %v518
    %v583 = vunpack.c.l.b16 %v519
    %v584 = vunpack.c.l.b16 %v520
    %v585 = vunpack.c.l.b16 %v521
    %v586 = vunpack.c.l.b16 %v522
    %v587 = vunpack.c.l.b16 %v523
    %v588 = vunpack.c.l.b16 %v524
    %v589 = vunpack.c.l.b16 %v525
    %v590 = vunpack.c.l.b16 %v526
    %v591 = vunpack.c.l.b16 %v527
    %v592 = vunpack.c.l.b16 %v528
    %v593 = vunpack.c.l.b16 %v529
    %v594 = vunpack.c.l.b16 %v530
    %v595 = vunpack.c.l.b16 %v531
    %v596 = vunpack.c.l.b16 %v532
    %v597 = vunpack.c.l.b16 %v533
    %v598 = vunpack.c.l.b16 %v534
    %v599 = vunpack.c.l.b16 %v535
    %v600 = vunpack.c.l.b16 %v536
    %v601 = vunpack.c.l.b16 %v537
    %v602 = vunpack.c.l.b16 %v538
    %v603 = vunpack.c.l.b16 %v539
    %v604 = vunpack.c.l.b16 %v540
    %v605 = vunpack.c.l.b16 %v541
    %v606 = vunpack.c.l.b16 %v542
    %v607 = vunpack.c.l.b16 %v543
    %v608 = vunpack.c.l.b16 %v544
    %v609 = vunpack.c.l.b16 %v545
    %v610 = vunpack.c.l.b16 %v546
    %v611 = vunpack.c.l.b16 %v547
    %v612 = vpack.c.b16 %v581, %v580
    %v613 = vpack.c.b16 %v583, %v582
    %v614 = vpack.c.b16 %v585, %v584
    %v615 = vpack.c.b16 %v587, %v586
    %v616 = vpack.c.b16 %v589, %v588
    %v617 = vpack.c.b16 %v591, %v590
    %v618 = vpack.c.b16 %v593, %v592
    %v619 = vpack.c.b16 %v595, %v594
    %v620 = vpack.c.b16 %v597, %v596
    %v621 = vpack.c.b16 %v599, %v598
    %v622 = vpack.c.b16 %v601, %v600
    %v623 = vpack.c.b16 %v603, %v602
    %v624 = vpack.c.b16 %v605, %v604
    %v625 = vpack.c.b16 %v607, %v606
    %v626 = vpack.c.b16 %v609, %v608
    %v627 = vpack.c.b16 %v611, %v610
    %644 = vmatprep.subr.bf16.mxu0 0
    %645 = vmatpush1.bf16.msra.mxu0 %v619
    %646 = vmatprep.subr.bf16.mxu0 0
    %647 = vmatpush1.bf16.msra.mxu0 %v618
    %648 = vmatprep.subr.bf16.mxu0 0
    %649 = vmatpush1.bf16.msra.mxu0 %v617
    %650 = vmatprep.subr.bf16.mxu0 0
    %651 = vmatpush1.bf16.msra.mxu0 %v616
    %652 = vmatprep.subr.bf16.mxu0 0
    %653 = vmatpush1.bf16.msra.mxu0 %v615
    %654 = vmatprep.subr.bf16.mxu0 0
    %655 = vmatpush1.bf16.msra.mxu0 %v614
    %656 = vmatprep.subr.bf16.mxu0 0
    %657 = vmatpush1.bf16.msra.mxu0 %v613
    %658 = vmatprep.subr.bf16.mxu0 0
    %659 = vmatpush1.bf16.msra.mxu0 %v612
    %660 = vmatprep.subr.bf16.mxu0 0
    %661 = vmatpush2.bf16.msra.mxu0 %v627
    %662 = vmatprep.subr.bf16.mxu0 0
    %663 = vmatpush2.bf16.msra.mxu0 %v626
    %664 = vmatprep.subr.bf16.mxu0 0
    %665 = vmatpush2.bf16.msra.mxu0 %v625
    %666 = vmatprep.subr.bf16.mxu0 0
    %667 = vmatpush2.bf16.msra.mxu0 %v624
    %668 = vmatprep.subr.bf16.mxu0 0
    %669 = vmatpush2.bf16.msra.mxu0 %v623
    %670 = vmatprep.subr.bf16.mxu0 0
    %671 = vmatpush2.bf16.msra.mxu0 %v622
    %672 = vmatprep.subr.bf16.mxu0 0
    %673 = vmatpush2.bf16.msra.mxu0 %v621
    %674 = vmatprep.subr.bf16.mxu0 0
    %675 = vmatpush2.bf16.msra.mxu0 %v620
    %676 = vmatprep.mubr.bf16.mxu0 %v515
    %677 = vmatmul.mubr.bf16.gmra.mxu0 %v514
    %v678 = vpop.f32.mrf.mxu0
    %v679 = vadd.f32 %v495, %v678
    %v680 = vpop.f32.mrf.mxu0
    %v681 = vpop.f32.mrf.mxu0
    %v682 = vpop.f32.mrf.mxu0
    %683 = vdwg.mxu0
    %vm684 = vcmask 254976
    %v685 = vsel %vm684, %v679, 0.0
    %686 = vadd.xlane.f32.xlu0 %v685
    %v687 = vpop.xlane.xlu0 %686
    %v688 = vrcp.pop 32.0
    %v689 = vmul.f32 %v687, %v688
    %v690 = vsub.f32 %v679, %v689
    %v691 = vmul.f32 %v690, %v690
    %v692 = vsel %vm684, %v691, 0.0
    %693 = vadd.xlane.f32.xlu0 %v692
    %v694 = vpop.xlane.xlu0 %693
    %v695 = vmul.f32 %v694, %v688
    %v696 = vadd.f32 %v695, 1e-05
    %v697 = vrsqrt.pop %v696
    %v698 = vmul.f32 %v690, %v697
    %v699 = vld [vmem:[%s7] sm:$0x1]
    %v701 = vlaneseq
    %v702 = vshrl.u32 %v701, 7
    %v703 = vsub.s32 0, %v702
    %v704 = vrot.slane %v699, %v703
    %v706 = vmul.f32 %v698, %v704
    %v707 = vld [vmem:[%s8] sm:$0x1]
    %v709 = vlaneseq
    %v710 = vshrl.u32 %v709, 7
    %v711 = vsub.s32 0, %v710
    %v712 = vrot.slane %v707, %v711
    %v714 = vadd.f32 %v706, %v712
    %715 = vst.msk [vmem:[#allocation2] sm:$0x3] %vm684, %v714
    // Predicated region
    $region38: #{tpu_custom_call.1} parent=1 // pred_check
      _
    $region39: #{tpu_custom_call.1} parent=1 // pred_check_branch
      %717 = sbr.rel (0) target = $region41
    $region40: #{tpu_custom_call.1} parent=1 // pred_region
      %s719 = ssub.s32 32, 32
      %720 = vsyncadd [#allocation3], %s719
      %s722 = sshll.u32 [#allocation2], 4
      %s723 = int_to_ptr.vmem [resolvable:$true] %s722
      %725 = dma.vmem_to_hbm [thread:$0]  %s723, 32, %s9, [#allocation3]
    $region41: #{tpu_custom_call.1} parent=1 // pred_fallthru
      _
    // Predicated region
    $region42: #{tpu_custom_call.1} parent=1 // pred_check
      _
    $region43: #{tpu_custom_call.1} parent=1 // pred_check_branch
      %727 = sbr.rel (0) target = $region45
    $region44: #{tpu_custom_call.1} parent=1 // pred_region
      %728 = dma.done [#allocation3], 32
    $region45: #{tpu_custom_call.1} parent=1 // pred_fallthru
      _
    %729 = vsyncpa [#allocation3], 1

</llo_original>
